<compile_context>
chip_gen: v6e
topology: v6e:2x2x1
jax: 0.10.0
libtpu: 0.0.40
codegen_flags: <defaults>
</compile_context>

<pallas_src>
import functools

import jax
import jax.numpy as jnp
import numpy as np
from jax.experimental import pallas as pl
from jax.experimental.pallas import tpu as pltpu


def _round_up(x, m):
    return ((x + m - 1) // m) * m


def _tpu_generation_info():
    """(target x-block bytes, vmem_limit cap bytes, tensorcores/chip) per TPU generation."""
    kind = ""
    try:
        dev = jax.devices()[0]
        if dev.platform == "tpu":
            kind = dev.device_kind.lower()
    except Exception:
        pass
    if "v7" in kind:
        # 64 MiB VMEM, 3.2 TB/s HBM, 2 TensorCores: modest blocks, tight VMEM budget.
        return 8 * 2**20, 46 * 2**20, 2
    if any(t in kind for t in ("v6", "trillium", "v5", "lite")):
        # 128 MiB VMEM: large blocks amortize the ~0.35us per-grid-step overhead.
        return 14 * 2**20, 96 * 2**20, 1
    return 4 * 2**20, 32 * 2**20, 1  # unknown / interpreter: conservative defaults


def _choose_tiles(B, L, D, itemsize, target_block_bytes, num_cores):
    """Pick (TB, TL) honoring the (8,128) block rule and the dtype sublane pack."""
    if B > 256:
        tb = 256
    elif num_cores >= 2 and B >= 16:
        tb = _round_up(-(-B // 2), 8)        # >=2 batch blocks so both TCs get work
    else:
        tb = B                               # full dim -> always a legal block shape
    sub = max(8, 32 // itemsize)             # sublane pack: 8 f32 / 16 bf16 / 32 int8
    tl = target_block_bytes // max(1, tb * D * itemsize)
    if tl >= L:
        tl = L
    else:
        tl = max(sub, (tl // sub) * sub)
        tl = min(tl, L)
    return tb, tl


def _head_kernel(min_lb_ref, max_lb_ref, len_ref, x_ref, w1_ref, b1_ref, w2_ref,
                 b2_ref, out_ref, acc_ref, *, pooling, tl):
    b = pl.program_id(0)
    l = pl.program_id(1)
    nl = pl.num_programs(1)

    @pl.when(l == 0)
    def _():
        acc_ref[...] = jnp.zeros_like(acc_ref)

    # Gate compute off on L tiles that hold no needed tokens (their DMA is already
    # skipped by the clamped index_map: the block index repeats).
    if pooling == "mean":
        active = l <= max_lb_ref[b]
    else:  # "last"
        active = jnp.logical_and(l >= min_lb_ref[b], l <= max_lb_ref[b])

    @pl.when(active)
    def _():
        x = x_ref[...]                                    # (TB, TL, D), input dtype
        tb, tl_blk, _ = x.shape
        last_idx = len_ref[...] - 1                       # (TB, 1) int32
        # Positions built directly in (TB, TL, 1): the compare result broadcasts
        # along lanes (D) without a lane<->sublane relayout.
        pos = jax.lax.broadcasted_iota(jnp.int32, (tb, tl_blk, 1), 1) + l * tl
        if pooling == "mean":
            keep = pos <= last_idx[:, :, None]            # cumsum-gather semantics
        else:
            keep = pos == last_idx[:, :, None]
        # Select in the input dtype (halves the live temporary for bf16 inputs; also
        # zeroes garbage in padded tail rows of a partial L block); accumulate in f32.
        masked = jnp.where(keep, x, jnp.zeros((), x.dtype))
        acc_ref[...] += jnp.sum(masked, axis=1, dtype=jnp.float32)

    @pl.when(l == nl - 1)
    def _():
        pooled = acc_ref[...]
        if pooling == "mean":
            # Guard all-pad rows (the PyTorch reference would divide by zero -> NaN).
            denom = jnp.maximum(len_ref[...].astype(jnp.float32), 1.0)
            pooled = pooled / denom
        # TODO(synk): Dropout omitted (identity in eval mode); a training-mode kernel
        # would draw a mask with pltpu.prng_seed / pltpu.prng_random_bits.
        h = jnp.dot(pooled.astype(w1_ref.dtype), w1_ref[...],
                    preferred_element_type=jnp.float32,
                    precision=jax.lax.Precision.HIGHEST)
        h = jnp.maximum(h + b1_ref[...], 0.0)
        y = jnp.dot(h.astype(w2_ref.dtype), w2_ref[...],
                    preferred_element_type=jnp.float32,
                    precision=jax.lax.Precision.HIGHEST)
        out_ref[...] = (y + b2_ref[...]).astype(out_ref.dtype)


def prepare_head_params(params, weights_dtype=jnp.float32):
    """Zero-pad H and C to lane multiples (128) ONCE, outside the per-call jit.

    params = (w1 (D,H), b1 (H,), w2 (H,C), b2 (C,)) -- x @ W + b convention.
    Returns (padded_params, num_classes). weights_dtype=bf16 halves resident weight
    VMEM on v7x for very large D/H (at a small accuracy cost)."""
    w1, b1, w2, b2 = params
    D, H = w1.shape
    C = w2.shape[1]
    Hp, Cp = _round_up(H, 128), _round_up(C, 128)
    w1p = jnp.zeros((D, Hp), weights_dtype).at[:, :H].set(w1.astype(weights_dtype))
    b1p = jnp.zeros((1, Hp), jnp.float32).at[0, :H].set(b1.reshape(-1).astype(jnp.float32))
    w2p = jnp.zeros((Hp, Cp), weights_dtype).at[:H, :C].set(w2.astype(weights_dtype))
    b2p = jnp.zeros((1, Cp), jnp.float32).at[0, :C].set(b2.reshape(-1).astype(jnp.float32))
    return (w1p, b1p, w2p, b2p), C


@functools.partial(jax.jit,
                   static_argnames=("num_classes", "pooling", "keep_pool_dim", "tile_l"))
def encoder_embedding_output_head(inputs, padding_mask, padded_params, num_classes,
                                  pooling="mean", keep_pool_dim=True, tile_l=None):
    """inputs: (B, L, D) float, padding_mask: (B, L) {0,1}. padded_params from
    prepare_head_params(). Returns (B,1,C) if keep_pool_dim else (B,C)."""
    if pooling not in ("mean", "last"):
        raise NotImplementedError(pooling)
    B, L, D = inputs.shape
    w1p, b1p, w2p, b2p = padded_params
    Hp = w1p.shape[1]
    Cp = w2p.shape[1]
    itemsize = jnp.dtype(inputs.dtype).itemsize

    target_blk, vmem_cap, num_cores = _tpu_generation_info()
    TB, TL = _choose_tiles(B, L, D, itemsize, target_blk, num_cores)
    if tile_l is not None:                      # test / tuning override
        TL = min(int(tile_l), L)
        if TL < L:
            TL = max(8, (TL // 8) * 8)
    nbt = pl.cdiv(B, TB)
    nl = pl.cdiv(L, TL)
    grid = (nbt, nl)

    # Per-row valid-token count == cumsum(mask)[:, -1] of the reference.
    lengths = jnp.sum(padding_mask.astype(jnp.int32), axis=-1)          # (B,)
    lengths2d = lengths[:, None]                                        # (B,1)

    # Per-batch-tile min / max index of the L block holding the last valid token.
    lb_row = jnp.clip(lengths - 1, 0, L - 1) // TL                      # (B,) int32
    pad = nbt * TB - B
    max_src = jnp.pad(lb_row, (0, pad), constant_values=0) if pad else lb_row
    min_src = jnp.pad(lb_row, (0, pad), constant_values=nl - 1) if pad else lb_row
    max_lb = jnp.max(max_src.reshape(nbt, TB), axis=1).astype(jnp.int32)
    min_lb = jnp.min(min_src.reshape(nbt, TB), axis=1).astype(jnp.int32)

    # Data-dependent x index_maps (prefetched scalars are passed positionally).
    # When the returned block index repeats across l, Pallas skips the DMA.
    if pooling == "mean":
        x_index = lambda b, l, mn, mx: (b, jnp.minimum(l, mx[b]), 0)
    else:  # "last": only the tiles in [min_lb, max_lb] are ever fetched
        x_index = lambda b, l, mn, mx: (b, jnp.minimum(jnp.maximum(l, mn[b]), mx[b]), 0)
    len_index = lambda b, l, mn, mx: (b, 0)
    w_index = lambda b, l, mn, mx: (0, 0)
    out_index = lambda b, l, mn, mx: (b, 0)

    kernel = functools.partial(_head_kernel, pooling=pooling, tl=TL)

    # VMEM budget: pipeline buffers + masked temp + resident weights + intermediates.
    w_bytes = ((D * Hp + Hp * Cp) * jnp.dtype(w1p.dtype).itemsize + (Hp + Cp) * 4)
    x_blk = TB * TL * D * itemsize
    vmem_need = (3 * x_blk                      # 2 pipeline buffers + masked temporary
                 + TB * D * 4                   # f32 partial-sum temporary
                 + 2 * w_bytes                  # weights (double-buffered by default)
                 + 2 * TB * 128 * 4             # lengths block (lane-padded)
                 + 2 * TB * Cp * 4              # output block
                 + TB * D * 4                   # accumulator scratch
                 + TB * Hp * 4 + TB * Cp * 4)   # h / y intermediates
    vmem_limit = int(min(max(vmem_need + 4 * 2**20, 32 * 2**20), vmem_cap))

    x_bytes = (B * L * D if pooling == "mean" else B * TL * D) * itemsize
    cost = pl.CostEstimate(
        flops=2 * B * L * D + 2 * B * (D * Hp + Hp * Cp),
        transcendentals=0,
        bytes_accessed=x_bytes + B * 4 + w_bytes + B * Cp * 4,
    )

    out_padded = pl.pallas_call(
        kernel,
        out_shape=jax.ShapeDtypeStruct((B, Cp), jnp.float32),
        grid_spec=pltpu.PrefetchScalarGridSpec(
            num_scalar_prefetch=2,                 # min_lb, max_lb -> SMEM
            grid=grid,
            in_specs=[
                pl.BlockSpec((TB, 1), len_index),       # lengths (tiny, resident per b)
                pl.BlockSpec((TB, TL, D), x_index),     # x (streamed, clamped fetch)
                pl.BlockSpec((D, Hp), w_index),         # w1 (resident)
                pl.BlockSpec((1, Hp), w_index),         # b1
                pl.BlockSpec((Hp, Cp), w_index),        # w2
                pl.BlockSpec((1, Cp), w_index),         # b2
            ],
            out_specs=pl.BlockSpec((TB, Cp), out_index),
            scratch_shapes=[pltpu.VMEM((TB, D), jnp.float32)],
        ),
        compiler_params=pltpu.CompilerParams(
            dimension_semantics=("parallel", "arbitrary"),
            vmem_limit_bytes=vmem_limit),
        cost_estimate=cost,
    )(min_lb, max_lb, lengths2d, inputs, w1p, b1p, w2p, b2p)

    out = out_padded[:, :num_classes]            # drop lane padding
    if keep_pool_dim:
        out = out[:, None, :]                    # (B, 1, C)
    return out


def _init_params(key, embedding_size, hidden, num_classes):
    """Deterministic PyTorch-style Linear init: U(-1/sqrt(fan_in), 1/sqrt(fan_in))."""
    k1, k2, k3, k4 = jax.random.split(key, 4)
    lim1 = 1.0 / np.sqrt(embedding_size)
    lim2 = 1.0 / np.sqrt(hidden)
    w1 = jax.random.uniform(k1, (embedding_size, hidden), jnp.float32, -lim1, lim1)
    b1 = jax.random.uniform(k2, (hidden,), jnp.float32, -lim1, lim1)
    w2 = jax.random.uniform(k3, (hidden, num_classes), jnp.float32, -lim2, lim2)
    b2 = jax.random.uniform(k4, (num_classes,), jnp.float32, -lim2, lim2)
    return w1, b1, w2, b2


def _reference(inputs, mask, params, pooling, keep_pool_dim):
    """Pure-JAX reference mirroring the PyTorch forward (eval mode)."""
    w1, b1, w2, b2 = params
    last_idx = jnp.sum(mask.astype(jnp.int32), axis=-1) - 1
    if pooling == "mean":
        cs = jnp.cumsum(inputs.astype(jnp.float32), axis=1)
        pooled = cs[jnp.arange(inputs.shape[0]), last_idx]
        pooled = pooled / (last_idx[:, None].astype(jnp.float32) + 1.0)
    else:
        pooled = inputs[jnp.arange(inputs.shape[0]), last_idx].astype(jnp.float32)
    h = jnp.maximum(jnp.dot(pooled, w1, precision=jax.lax.Precision.HIGHEST) + b1, 0.0)
    y = jnp.dot(h, w2, precision=jax.lax.Precision.HIGHEST) + b2
    if keep_pool_dim:
        y = y[:, None, :]
    return y


if __name__ == "__main__":
    key = jax.random.PRNGKey(0)
    k_in, k_p, k_in2 = jax.random.split(key, 3)

    # ---- config 1: tiny demo shapes (single L tile) ----
    B, L, D = 2, 8, 32        # batch, seq len, embedding_size
    H, C = 64, 4              # layers=[64], num_classes=4
    inputs = jax.random.normal(k_in, (B, L, D), jnp.float32)
    lengths = jnp.array([8, 5], dtype=jnp.int32)
    padding_mask = (jnp.arange(L)[None, :] < lengths[:, None]).astype(jnp.int32)
    params = _init_params(k_p, D, H, C)
    padded_params, n_cls = prepare_head_params(params)   # pad/cast weights ONCE

    out = encoder_embedding_output_head(inputs, padding_mask, padded_params,
                                        num_classes=n_cls, pooling="mean",
                                        keep_pool_dim=True)
    out = jax.block_until_ready(out)
    ref = _reference(inputs, padding_mask, params, "mean", True)
    np.testing.assert_allclose(np.asarray(out), np.asarray(ref), rtol=1e-3, atol=1e-3)
    assert out.shape == (B, 1, C)

    out_last = encoder_embedding_output_head(inputs, padding_mask, padded_params,
                                             num_classes=n_cls, pooling="last",
                                             keep_pool_dim=False)
    out_last = jax.block_until_ready(out_last)
    ref_last = _reference(inputs, padding_mask, params, "last", False)
    np.testing.assert_allclose(np.asarray(out_last), np.asarray(ref_last),
                               rtol=1e-3, atol=1e-3)
    assert out_last.shape == (B, C)

    # ---- config 2: multi L-tile path (exercises clamped index_maps / tile skipping) ----
    B2, L2 = 4, 64
    inputs2 = jax.random.normal(k_in2, (B2, L2, D), jnp.float32)
    lengths2 = jnp.array([40, 33, 17, 1], dtype=jnp.int32)
    mask2 = (jnp.arange(L2)[None, :] < lengths2[:, None]).astype(jnp.int32)
    for pooling in ("mean", "last"):
        o = encoder_embedding_output_head(inputs2, mask2, padded_params,
                                          num_classes=n_cls, pooling=pooling,
                                          keep_pool_dim=True, tile_l=16)
        o = jax.block_until_ready(o)
        r = _reference(inputs2, mask2, params, pooling, True)
        np.testing.assert_allclose(np.asarray(o), np.asarray(r), rtol=1e-3, atol=1e-3)
        assert o.shape == (B2, 1, C)

    print("KERNEL_OK")
</pallas_src>

<mosaic_0001>
module attributes {stable_mosaic.version = 11 : i64} {
  func.func @_head_kernel(%arg0: i32, %arg1: i32, %arg2: memref<1xi32, #tpu.memory_space<smem>>, %arg3: memref<1xi32, #tpu.memory_space<smem>>, %arg4: memref<2x1xi32, #tpu.memory_space<vmem>>, %arg5: memref<2x8x32xf32, #tpu.memory_space<vmem>>, %arg6: memref<32x128xf32, #tpu.memory_space<vmem>>, %arg7: memref<1x128xf32, #tpu.memory_space<vmem>>, %arg8: memref<128x128xf32, #tpu.memory_space<vmem>>, %arg9: memref<1x128xf32, #tpu.memory_space<vmem>>, %arg10: memref<2x128xf32, #tpu.memory_space<vmem>>, %arg11: memref<2x32xf32, #tpu.memory_space<vmem>>) attributes {dimension_semantics = [#tpu.dimension_semantics<parallel>, #tpu.dimension_semantics<arbitrary>], iteration_bounds = array<i64: 1, 1>, scalar_prefetch = 2 : i64, scratch_operands = 1 : i64, tpu.core_type = #tpu.core_type<tc>, window_params = [{transform_indices = @transform_0, window_bounds = array<i64: 2, 1>}, {transform_indices = @transform_1, window_bounds = array<i64: 2, 8, 32>}, {pipeline_mode = #tpu.pipeline_mode<synchronous>, transform_indices = @transform_2, window_bounds = array<i64: 32, 128>}, {pipeline_mode = #tpu.pipeline_mode<synchronous>, transform_indices = @transform_3, window_bounds = array<i64: 1, 128>}, {pipeline_mode = #tpu.pipeline_mode<synchronous>, transform_indices = @transform_4, window_bounds = array<i64: 128, 128>}, {pipeline_mode = #tpu.pipeline_mode<synchronous>, transform_indices = @transform_5, window_bounds = array<i64: 1, 128>}, {transform_indices = @transform_6, window_bounds = array<i64: 2, 128>}]} {
    %c0_i32 = arith.constant 0 : i32
    %0 = arith.cmpi eq, %arg1, %c0_i32 : i32
    %1 = arith.extui %0 : i1 to i32
    %c0_i32_0 = arith.constant 0 : i32
    %2 = arith.cmpi ne, %1, %c0_i32_0 : i32
    scf.if %2 {
      %cst = arith.constant 0.000000e+00 : f32
      %11 = vector.broadcast %cst : f32 to vector<2x32xf32>
      %c0 = arith.constant 0 : index
      %c0_4 = arith.constant 0 : index
      %12 = vector.load %arg11[%c0, %c0_4] : memref<2x32xf32, #tpu.memory_space<vmem>>, vector<2x32xf32>
      tpu.vector_store %arg11[%c0, %c0_4], %11 {strides = array<i32>} : memref<2x32xf32, #tpu.memory_space<vmem>>, vector<2x32xf32>,
    } else {
    }
    %3 = arith.index_cast %arg0 : i32 to index
    %4 = memref.load %arg3[%3] : memref<1xi32, #tpu.memory_space<smem>>
    %5 = arith.cmpi sle, %arg1, %4 : i32
    %6 = arith.extui %5 : i1 to i32
    %c0_i32_1 = arith.constant 0 : i32
    %7 = arith.cmpi ne, %6, %c0_i32_1 : i32
    scf.if %7 {
      %c0 = arith.constant 0 : index
      %c0_4 = arith.constant 0 : index
      %c0_5 = arith.constant 0 : index
      %11 = vector.load %arg5[%c0, %c0_4, %c0_5] : memref<2x8x32xf32, #tpu.memory_space<vmem>>, vector<2x8x32xf32>
      %c0_6 = arith.constant 0 : index
      %c0_7 = arith.constant 0 : index
      %12 = vector.load %arg4[%c0_6, %c0_7] : memref<2x1xi32, #tpu.memory_space<vmem>>, vector<2x1xi32>
      %c1_i32 = arith.constant 1 : i32
      %13 = vector.broadcast %c1_i32 : i32 to vector<2x1xi32>
      %14 = arith.subi %12, %13 : vector<2x1xi32>
      %15 = tpu.iota {dimensions = array<i32: 1>} : vector<2x8x1xi32>
      %c8_i32 = arith.constant 8 : i32
      %16 = arith.muli %arg1, %c8_i32 : i32
      %17 = vector.broadcast %16 : i32 to vector<2x8x1xi32>
      %18 = arith.addi %15, %17 : vector<2x8x1xi32>
      %19 = vector.shape_cast %14 : vector<2x1xi32> to vector<2x1x1xi32>
      %20 = vector.broadcast %19 : vector<2x1x1xi32> to vector<2x8x1xi32>
      %21 = arith.cmpi sle, %18, %20 : vector<2x8x1xi32>
      %cst = arith.constant 0.000000e+00 : f32
      %22 = vector.shape_cast %21 : vector<2x8x1xi1> to vector<2x8x1xi1>
      %23 = vector.broadcast %22 : vector<2x8x1xi1> to vector<2x8x32xi1>
      %24 = vector.broadcast %cst : f32 to vector<2x8x32xf32>
      %25 = arith.select %23, %11, %24 : vector<2x8x32xi1>, vector<2x8x32xf32>
      %c0_8 = arith.constant 0 : index
      %c0_9 = arith.constant 0 : index
      %26 = vector.load %arg11[%c0_8, %c0_9] : memref<2x32xf32, #tpu.memory_space<vmem>>, vector<2x32xf32>
      %cst_10 = arith.constant dense<0.000000e+00> : vector<2x32xf32>
      %27 = vector.multi_reduction <add>, %25, %cst_10 [1] : vector<2x8x32xf32> to vector<2x32xf32>
      %28 = arith.addf %26, %27 : vector<2x32xf32>
      %c0_11 = arith.constant 0 : index
      %c0_12 = arith.constant 0 : index
      %29 = vector.load %arg11[%c0_11, %c0_12] : memref<2x32xf32, #tpu.memory_space<vmem>>, vector<2x32xf32>
      tpu.vector_store %arg11[%c0_11, %c0_12], %28 {strides = array<i32>} : memref<2x32xf32, #tpu.memory_space<vmem>>, vector<2x32xf32>,
    } else {
    }
    %c0_i32_2 = arith.constant 0 : i32
    %8 = arith.cmpi eq, %arg1, %c0_i32_2 : i32
    %9 = arith.extui %8 : i1 to i32
    %c0_i32_3 = arith.constant 0 : i32
    %10 = arith.cmpi ne, %9, %c0_i32_3 : i32
    scf.if %10 {
      %c0 = arith.constant 0 : index
      %c0_4 = arith.constant 0 : index
      %11 = vector.load %arg11[%c0, %c0_4] : memref<2x32xf32, #tpu.memory_space<vmem>>, vector<2x32xf32>
      %c0_5 = arith.constant 0 : index
      %c0_6 = arith.constant 0 : index
      %12 = vector.load %arg4[%c0_5, %c0_6] : memref<2x1xi32, #tpu.memory_space<vmem>>, vector<2x1xi32>
      %13 = arith.sitofp %12 : vector<2x1xi32> to vector<2x1xf32>
      %cst = arith.constant 1.000000e+00 : f32
      %14 = vector.broadcast %cst : f32 to vector<2x1xf32>
      %15 = arith.maximumf %13, %14 : vector<2x1xf32>
      %16 = vector.broadcast %15 : vector<2x1xf32> to vector<2x32xf32>
      %17 = arith.divf %11, %16 : vector<2x32xf32>
      %c0_7 = arith.constant 0 : index
      %c0_8 = arith.constant 0 : index
      %18 = vector.load %arg6[%c0_7, %c0_8] : memref<32x128xf32, #tpu.memory_space<vmem>>, vector<32x128xf32>
      %cst_9 = arith.constant dense<0.000000e+00> : vector<2x128xf32>
      %19 = tpu.matmul %17, %18, %cst_9 {dimension_numbers = #tpu.dot_dimension_numbers<[1], [0], [0], [1], [0, 0, 1, 1], [], []>, precision = #tpu.contract_precision<fp32>} : vector<2x32xf32>, vector<32x128xf32>, vector<2x128xf32> -> vector<2x128xf32>
      %c0_10 = arith.constant 0 : index
      %c0_11 = arith.constant 0 : index
      %20 = vector.load %arg7[%c0_10, %c0_11] : memref<1x128xf32, #tpu.memory_space<vmem>>, vector<1x128xf32>
      %21 = vector.broadcast %20 : vector<1x128xf32> to vector<2x128xf32>
      %22 = arith.addf %19, %21 : vector<2x128xf32>
      %cst_12 = arith.constant 0.000000e+00 : f32
      %23 = vector.broadcast %cst_12 : f32 to vector<2x128xf32>
      %24 = arith.maximumf %22, %23 : vector<2x128xf32>
      %c0_13 = arith.constant 0 : index
      %c0_14 = arith.constant 0 : index
      %25 = vector.load %arg8[%c0_13, %c0_14] : memref<128x128xf32, #tpu.memory_space<vmem>>, vector<128x128xf32>
      %cst_15 = arith.constant dense<0.000000e+00> : vector<2x128xf32>
      %26 = tpu.matmul %24, %25, %cst_15 {dimension_numbers = #tpu.dot_dimension_numbers<[1], [0], [0], [1], [0, 0, 1, 1], [], []>, precision = #tpu.contract_precision<fp32>} : vector<2x128xf32>, vector<128x128xf32>, vector<2x128xf32> -> vector<2x128xf32>
      %c0_16 = arith.constant 0 : index
      %c0_17 = arith.constant 0 : index
      %27 = vector.load %arg9[%c0_16, %c0_17] : memref<1x128xf32, #tpu.memory_space<vmem>>, vector<1x128xf32>
      %28 = vector.broadcast %27 : vector<1x128xf32> to vector<2x128xf32>
      %29 = arith.addf %26, %28 : vector<2x128xf32>
      %c0_18 = arith.constant 0 : index
      %c0_19 = arith.constant 0 : index
      %30 = vector.load %arg10[%c0_18, %c0_19] : memref<2x128xf32, #tpu.memory_space<vmem>>, vector<2x128xf32>
      tpu.vector_store %arg10[%c0_18, %c0_19], %29 {strides = array<i32>} : memref<2x128xf32, #tpu.memory_space<vmem>>, vector<2x128xf32>,
    } else {
    }
    return
  }
  func.func @transform_0(%arg0: i32, %arg1: i32, %arg2: memref<1xi32, #tpu.memory_space<smem>>, %arg3: memref<1xi32, #tpu.memory_space<smem>>) -> (i32, i32) {
    %c0_i32 = arith.constant 0 : i32
    %c0_i32_0 = arith.constant 0 : i32
    return %arg0, %c0_i32 : i32, i32
  }
  func.func @transform_1(%arg0: i32, %arg1: i32, %arg2: memref<1xi32, #tpu.memory_space<smem>>, %arg3: memref<1xi32, #tpu.memory_space<smem>>) -> (i32, i32, i32) {
    %0 = arith.index_cast %arg0 : i32 to index
    %1 = memref.load %arg3[%0] : memref<1xi32, #tpu.memory_space<smem>>
    %2 = arith.minsi %arg1, %1 : i32
    %c0_i32 = arith.constant 0 : i32
    %c0_i32_0 = arith.constant 0 : i32
    return %arg0, %2, %c0_i32 : i32, i32, i32
  }
  func.func @transform_2(%arg0: i32, %arg1: i32, %arg2: memref<1xi32, #tpu.memory_space<smem>>, %arg3: memref<1xi32, #tpu.memory_space<smem>>) -> (i32, i32) {
    %c0_i32 = arith.constant 0 : i32
    %c0_i32_0 = arith.constant 0 : i32
    %c0_i32_1 = arith.constant 0 : i32
    return %c0_i32, %c0_i32_0 : i32, i32
  }
  func.func @transform_3(%arg0: i32, %arg1: i32, %arg2: memref<1xi32, #tpu.memory_space<smem>>, %arg3: memref<1xi32, #tpu.memory_space<smem>>) -> (i32, i32) {
    %c0_i32 = arith.constant 0 : i32
    %c0_i32_0 = arith.constant 0 : i32
    %c0_i32_1 = arith.constant 0 : i32
    return %c0_i32, %c0_i32_0 : i32, i32
  }
  func.func @transform_4(%arg0: i32, %arg1: i32, %arg2: memref<1xi32, #tpu.memory_space<smem>>, %arg3: memref<1xi32, #tpu.memory_space<smem>>) -> (i32, i32) {
    %c0_i32 = arith.constant 0 : i32
    %c0_i32_0 = arith.constant 0 : i32
    %c0_i32_1 = arith.constant 0 : i32
    return %c0_i32, %c0_i32_0 : i32, i32
  }
  func.func @transform_5(%arg0: i32, %arg1: i32, %arg2: memref<1xi32, #tpu.memory_space<smem>>, %arg3: memref<1xi32, #tpu.memory_space<smem>>) -> (i32, i32) {
    %c0_i32 = arith.constant 0 : i32
    %c0_i32_0 = arith.constant 0 : i32
    %c0_i32_1 = arith.constant 0 : i32
    return %c0_i32, %c0_i32_0 : i32, i32
  }
  func.func @transform_6(%arg0: i32, %arg1: i32, %arg2: memref<1xi32, #tpu.memory_space<smem>>, %arg3: memref<1xi32, #tpu.memory_space<smem>>) -> (i32, i32) {
    %c0_i32 = arith.constant 0 : i32
    %c0_i32_0 = arith.constant 0 : i32
    return %arg0, %c0_i32 : i32, i32
  }
}

</mosaic_0001>

<llo_original>
// kernel: encoder_embedding_output_head.1
$region0: #{encoder_embedding_output_head.1}
  #allocation0 [shape = 'u32[]', space=smem, size = 0x4, offset = 0x4, fixed_abs, tag = 'smem constant byte address 0x4 - core index']
  #allocation1 [shape = 'u32[144,128]{1,0:T(1,128)}', space=vmem, size = 0x12000, scoped, tag = 'internal scratch']
  #allocation2 [shape = 'f32[2,32]{1,0:T(2,128)}', space=vmem, size = 0x400, scoped, tag = 'scratch operand']
  #allocation3 [shape = 's32[1]{0}', space=sflag, size = 0x4, scoped, tag = 'scoped memory for encoder_embedding_output_head.1']
  #allocation4 [shape = 's32[1]{0:T(128)S(6)}', space=smem, size = 0x200, scoped, tag = 'prefetched SMEM operand 0']
  #allocation5 [shape = 's32[1]{0:T(128)S(6)}', space=smem, size = 0x200, scoped, tag = 'prefetched SMEM operand 1']
  %s0 = inlined_call_operand.<no memory space> [shape: s32[1], index: 0, kind: input, shape index: {}]
  %s1 = inlined_call_operand.<no memory space> [shape: s32[1], index: 1, kind: input, shape index: {}]
  %s2 = inlined_call_operand.vmem [shape: s32[2,1], index: 2, kind: input, shape index: {}]
  %s3 = inlined_call_operand.vmem [shape: f32[2,8,32], index: 3, kind: input, shape index: {}]
  %s4 = inlined_call_operand.hbm [shape: f32[32,128], index: 4, kind: input, shape index: {}]
  %s5 = inlined_call_operand.vmem [shape: f32[1,128], index: 5, kind: input, shape index: {}]
  %s6 = inlined_call_operand.hbm [shape: f32[128,128], index: 6, kind: input, shape index: {}]
  %s7 = inlined_call_operand.vmem [shape: f32[1,128], index: 7, kind: input, shape index: {}]
  %s8 = inlined_call_operand.hbm [shape: f32[2,128], index: 8, kind: output, shape index: {}]
  %s9 = sld [smem:[#allocation0]]
  $region54: #{encoder_embedding_output_head.1} parent=0
    _
  %s11 = ssub.s32 1, %s9
  %s12 = scalar_select 0, %s11, %s9
  %13 = sst [smem:[#allocation4]] %s0
  %14 = sst [smem:[#allocation5]] %s1
  $region1: #{encoder_embedding_output_head.1} parent=0
    #allocation6 [shape = 'u8[16384]{0}', space=vmem, size = 0x4000, scoped, tag = 'input window, operand 4, single buffered']
    #allocation7 [shape = 's32[1]{0}', space=sflag, size = 0x4, scoped, tag = 'scoped memory for encoder_embedding_output_head.1']
    #allocation8 [shape = 's32[1]{0}', space=sflag, size = 0x4, scoped, tag = 'scoped memory for encoder_embedding_output_head.1']
    #allocation9 [shape = 'u8[65536]{0}', space=vmem, size = 0x10000, scoped, tag = 'input window, operand 6, single buffered']
    #allocation10 [shape = 's32[1]{0}', space=sflag, size = 0x4, scoped, tag = 'scoped memory for encoder_embedding_output_head.1']
    #allocation11 [shape = 'u8[1024]{0}', space=vmem, size = 0x400, scoped, tag = 'output window, operand 0, single buffered']
    %15 = vsyncpa [#allocation7], 0
    %16 = vsyncpa [#allocation10], 0
    %17 = vsyncpa [#allocation8], 0
    // Predicated region
    $region2: #{encoder_embedding_output_head.1} parent=1 // pred_check
      _
    $region3: #{encoder_embedding_output_head.1} parent=1 // pred_check_branch
      %19 = sbr.rel (0) target = $region5
    $region4: #{encoder_embedding_output_head.1} parent=1 // pred_region
      _
    $region5: #{encoder_embedding_output_head.1} parent=1 // pred_fallthru
      _
    // Predicated region
    $region6: #{encoder_embedding_output_head.1} parent=1 // pred_check
      _
    $region7: #{encoder_embedding_output_head.1} parent=1 // pred_check_branch
      %21 = sbr.rel (0) target = $region9
    $region8: #{encoder_embedding_output_head.1} parent=1 // pred_region
      %s22 = sld [smem:[#allocation5]]
      %p23 = scmp.lt.s32.totalorder 0, %s22
      %s24 = scalar_select %p23, 0, %s22
      %p25 = scmp.lt.s32.totalorder %s24, 0
      %s26 = scalar_select %p25, %s24, 0
      %s27 = smul.addr %s26, 8
      %s28 = scalar_lea.vmem %s3, %s27
      %s29 = sld [smem:[#allocation5]]
      %p30 = scmp.lt.s32.totalorder 0, %s29
      %s31 = scalar_select %p30, 0, %s29
    $region9: #{encoder_embedding_output_head.1} parent=1 // pred_fallthru
      _
    // Predicated region
    $region10: #{encoder_embedding_output_head.1} parent=1 // pred_check
      _
    $region11: #{encoder_embedding_output_head.1} parent=1 // pred_check_branch
      %33 = sbr.rel (0) target = $region13
    $region12: #{encoder_embedding_output_head.1} parent=1 // pred_region
      %s35 = ssub.s32 512, 512
      %36 = vsyncadd [#allocation7], %s35
      %s37 = sshll.u32 [#allocation6], 4
      %s38 = int_to_ptr.vmem [resolvable:$true] %s37
      %43 = dma.hbm_to_vmem [thread:$0]  %s4, 512, %s38, [#allocation7], 128, 128, 8
    $region13: #{encoder_embedding_output_head.1} parent=1 // pred_fallthru
      _
    // Predicated region
    $region14: #{encoder_embedding_output_head.1} parent=1 // pred_check
      _
    $region15: #{encoder_embedding_output_head.1} parent=1 // pred_check_branch
      %45 = sbr.rel (0) target = $region17
    $region16: #{encoder_embedding_output_head.1} parent=1 // pred_region
      _
    $region17: #{encoder_embedding_output_head.1} parent=1 // pred_fallthru
      _
    // Predicated region
    $region18: #{encoder_embedding_output_head.1} parent=1 // pred_check
      _
    $region19: #{encoder_embedding_output_head.1} parent=1 // pred_check_branch
      %47 = sbr.rel (0) target = $region21
    $region20: #{encoder_embedding_output_head.1} parent=1 // pred_region
      %s49 = ssub.s32 2048, 2048
      %50 = vsyncadd [#allocation10], %s49
      %s51 = sshll.u32 [#allocation9], 4
      %s52 = int_to_ptr.vmem [resolvable:$true] %s51
      %57 = dma.hbm_to_vmem [thread:$0]  %s6, 2048, %s52, [#allocation10], 128, 128, 8
    $region21: #{encoder_embedding_output_head.1} parent=1 // pred_fallthru
      _
    // Predicated region
    $region22: #{encoder_embedding_output_head.1} parent=1 // pred_check
      _
    $region23: #{encoder_embedding_output_head.1} parent=1 // pred_check_branch
      %59 = sbr.rel (0) target = $region25
    $region24: #{encoder_embedding_output_head.1} parent=1 // pred_region
      _
    $region25: #{encoder_embedding_output_head.1} parent=1 // pred_fallthru
      _
    // Predicated region
    $region26: #{encoder_embedding_output_head.1} parent=1 // pred_check
      _
    $region27: #{encoder_embedding_output_head.1} parent=1 // pred_check_branch
      %61 = sbr.rel (0) target = $region29
    $region28: #{encoder_embedding_output_head.1} parent=1 // pred_region
      %62 = dma.done [#allocation7], 512
    $region29: #{encoder_embedding_output_head.1} parent=1 // pred_fallthru
      _
    // Predicated region
    $region30: #{encoder_embedding_output_head.1} parent=1 // pred_check
      _
    $region31: #{encoder_embedding_output_head.1} parent=1 // pred_check_branch
      %64 = sbr.rel (0) target = $region33
    $region32: #{encoder_embedding_output_head.1} parent=1 // pred_region
      %65 = dma.done [#allocation10], 2048
    $region33: #{encoder_embedding_output_head.1} parent=1 // pred_fallthru
      _
    %s66 = sld [smem:[#allocation5]]
    %p67 = scmp.lt.s32.totalorder 0, %s66
    %s68 = scalar_select %p67, 0, %s66
    %p69 = scmp.lt.s32.totalorder %s68, 0
    %s70 = scalar_select %p69, %s68, 0
    %s71 = smul.addr %s70, 8
    %s72 = scalar_lea.vmem %s3, %s71
    %s73 = sld [smem:[#allocation5]]
    %p74 = scmp.lt.s32.totalorder 0, %s73
    %s75 = scalar_select %p74, 0, %s73
    %p76 = scmp.lt.s32.totalorder %s75, 0
    %s77 = scalar_select %p76, %s75, 0
    %s78 = smul.addr %s77, 8
    %s79 = scalar_lea.vmem %s3, %s78
    %s80 = sld [smem:[#allocation5]]
    %p81 = scmp.lt.s32.totalorder 0, %s80
    %s82 = scalar_select %p81, 0, %s80
    %p83 = scmp.eq.s32.totalorder 0, 0
    // Predicated region
    $region34: #{encoder_embedding_output_head.1} parent=1 // pred_check
      %p84 = pneg %p83
    $region35: #{encoder_embedding_output_head.1} parent=1 // pred_check_branch
      %86 = sbr.rel (%p84) target = $region37
    $region36: #{encoder_embedding_output_head.1} parent=1 // pred_region
      %vm87 = vcmask 254976
      %88 = vst.msk [vmem:[#allocation2] sm:$0x3] %vm87, 0.0
    $region37: #{encoder_embedding_output_head.1} parent=1 // pred_fallthru
      _
    %s89 = sld [smem:[#allocation5]]
    %p90 = scmp.le.s32.totalorder 0, %s89
    // Predicated region
    $region38: #{encoder_embedding_output_head.1} parent=1 // pred_check
      %p91 = pneg %p90
    $region39: #{encoder_embedding_output_head.1} parent=1 // pred_check_branch
      %93 = sbr.rel (%p91) target = $region41
    $region40: #{encoder_embedding_output_head.1} parent=1 // pred_region
      %v94 = vld [vmem:[%s79] sm:$0xff]
      %v95 = vld [vmem:[%s79 + $0x8] sm:$0xff]
      %v96 = vld [vmem:[%s2] sm:$0x3]
      %v97 = vsub.s32 %v96, 1
      %v98 = vlaneseq
      %v99 = vshrl.u32 %v98, 7
      %s100 = smul.u32 0, 8
      %v101 = vstv %s100
      %v102 = vadd.s32 %v99, %v101
      %v104 = vunpack.c.l.s4 1966171168
      %v105 = vunpack.c.0.s8 %v104
      %v106 = vlaneseq
      %v107 = vshrl.u32 %v106, 7
      %v108 = vsub.s32 %v105, %v107
      %v109 = vrot.slane %v97, %v108
      %v110 = vcombine.high %v109, %v109
      %v112 = vunpack.c.l.s4 1966171168
      %v113 = vunpack.c.0.s8 %v112
      %v114 = vlaneseq
      %v115 = vshrl.u32 %v114, 7
      %v116 = vsub.s32 %v113, %v115
      %v117 = vrot.slane %v109, %v116
      %v119 = vunpack.c.l.s4 1966171168
      %v120 = vunpack.c.0.s8 %v119
      %v121 = vlaneseq
      %v122 = vshrl.u32 %v121, 7
      %v123 = vsub.s32 %v120, %v122
      %v124 = vrot.slane %v110, %v123
      %v125 = vlaneseq
      %v126 = vshrl.u32 %v125, 7
      %v127 = vsub.s32 0, %v126
      %v128 = vrot.slane %v117, %v127
      %v129 = vlaneseq
      %v130 = vshrl.u32 %v129, 7
      %v131 = vsub.s32 0, %v130
      %v132 = vrot.slane %v124, %v131
      %vm133 = vcmp.le.s32.totalorder %v102, %v128
      %vm134 = vcmp.le.s32.totalorder %v102, %v132
      %v135 = vsel %vm133, 1, 0
      %v136 = vsel %vm134, 1, 0
      %137 = vset.pattern.permute.xlu0 0
      %138 = vperm.xlu0 %137, %v135
      %v139 = vpop.permute.xlu0 %138
      %140 = vset.pattern.permute.xlu0 0
      %141 = vperm.xlu0 %140, %v136
      %v142 = vpop.permute.xlu0 %141
      %vm143 = vcmp.eq.s32.totalorder %v139, 1
      %vm144 = vcmp.eq.s32.totalorder %v142, 1
      %v145 = vsel %vm143, %v94, 0.0
      %v146 = vsel %vm144, %v95, 0.0
      %v147 = vld [vmem:[#allocation2] sm:$0x3]
      %vm148 = vcmask 261120
      %v149 = vsel %vm148, %v145, 0.0
      %v150 = vrot.slane %v149, 4
      %v151 = vadd.f32 %v149, %v150
      %v152 = vrot.slane %v151, 2
      %v153 = vadd.f32 %v151, %v152
      %v154 = vrot.slane %v153, 1
      %v155 = vadd.f32 %v153, %v154
      %v156 = vsel %vm148, %v146, 0.0
      %v157 = vrot.slane %v156, 4
      %v158 = vadd.f32 %v156, %v157
      %v159 = vrot.slane %v158, 2
      %v160 = vadd.f32 %v158, %v159
      %v161 = vrot.slane %v160, 1
      %v162 = vadd.f32 %v160, %v161
      %vm165 = vcmask 1041409
      %v166 = vsel %vm165, %v162, %v155
      %v168 = vadd.f32 %v147, %v166
      %vm169 = vcmask 254976
      %170 = vst.msk [vmem:[#allocation2] sm:$0x3] %vm169, %v168
    $region41: #{encoder_embedding_output_head.1} parent=1 // pred_fallthru
      _
    // Predicated region
    $region42: #{encoder_embedding_output_head.1} parent=1 // pred_check
      %p171 = pneg %p83
    $region43: #{encoder_embedding_output_head.1} parent=1 // pred_check_branch
      %173 = sbr.rel (%p171) target = $region45
    $region44: #{encoder_embedding_output_head.1} parent=1 // pred_region
      %v174 = vld [vmem:[#allocation2] sm:$0x3]
      %v175 = vld [vmem:[%s2] sm:$0x3]
      %v176 = vcvt.s32.f32 %v175
      %v177 = vmax.f32 %v176, 1.0
      %179 = vset.pattern.permute.xlu0 0
      %180 = vperm.xlu0 %179, %v177
      %v181 = vpop.permute.xlu0 %180
      %v183 = vrcp.pop %v181
      %v184 = vmul.f32 %v174, %v183
      %v185 = vld [vmem:[#allocation6] sm:$0xff]
      %v186 = vld [vmem:[#allocation6 + $0x8] sm:$0xff]
      %v187 = vld [vmem:[#allocation6 + $0x10] sm:$0xff]
      %v188 = vld [vmem:[#allocation6 + $0x18] sm:$0xff]
      %v189 = vld [vmem:[%s5] sm:$0x1]
      %v191 = vlaneseq
      %v192 = vshrl.u32 %v191, 7
      %v193 = vsub.s32 0, %v192
      %v194 = vrot.slane %v189, %v193
      %vm196 = vcmask 261120
      %v198 = vsel %vm196, %v184, 0
      %200 = vmatprep.subr.mxu0 0.0
      %201 = vmatpush1.msra.mxu0 0.0
      %202 = vmatprep.subr.mxu0 0.0
      %203 = vmatpush1.msra.mxu0 0.0
      %204 = vmatprep.subr.mxu0 0.0
      %205 = vmatpush1.msra.mxu0 0.0
      %206 = vmatprep.subr.mxu0 0.0
      %207 = vmatpush1.msra.mxu0 0.0
      %208 = vmatprep.subr.mxu0 0.0
      %209 = vmatpush1.msra.mxu0 0.0
      %210 = vmatprep.subr.mxu0 0.0
      %211 = vmatpush1.msra.mxu0 0.0
      %212 = vmatprep.subr.mxu0 0.0
      %213 = vmatpush1.msra.mxu0 0.0
      %214 = vmatprep.subr.mxu0 0.0
      %215 = vmatpush1.msra.mxu0 0.0
      %216 = vmatprep.subr.mxu0 0.0
      %217 = vmatpush1.msra.mxu0 0.0
      %218 = vmatprep.subr.mxu0 0.0
      %219 = vmatpush1.msra.mxu0 0.0
      %220 = vmatprep.subr.mxu0 0.0
      %221 = vmatpush1.msra.mxu0 0.0
      %222 = vmatprep.subr.mxu0 0.0
      %223 = vmatpush1.msra.mxu0 0.0
      %224 = vmatprep.subr.mxu0 0.0
      %v225 = vand.u32 %v188, 4294901760
      %226 = vmatpush1.msra.mxu0 %v225
      %227 = vmatprep.subr.mxu0 0.0
      %v228 = vand.u32 %v187, 4294901760
      %229 = vmatpush1.msra.mxu0 %v228
      %230 = vmatprep.subr.mxu0 0.0
      %v231 = vand.u32 %v186, 4294901760
      %232 = vmatpush1.msra.mxu0 %v231
      %233 = vmatprep.subr.mxu0 0.0
      %v234 = vand.u32 %v185, 4294901760
      %235 = vmatpush1.msra.mxu0 %v234
      %236 = vmatprep.subr.mxu0 0.0
      %237 = vmatpush2.msra.mxu0 0.0
      %238 = vmatprep.subr.mxu0 0.0
      %239 = vmatpush2.msra.mxu0 0.0
      %240 = vmatprep.subr.mxu0 0.0
      %241 = vmatpush2.msra.mxu0 0.0
      %242 = vmatprep.subr.mxu0 0.0
      %243 = vmatpush2.msra.mxu0 0.0
      %244 = vmatprep.subr.mxu0 0.0
      %245 = vmatpush2.msra.mxu0 0.0
      %246 = vmatprep.subr.mxu0 0.0
      %247 = vmatpush2.msra.mxu0 0.0
      %248 = vmatprep.subr.mxu0 0.0
      %249 = vmatpush2.msra.mxu0 0.0
      %250 = vmatprep.subr.mxu0 0.0
      %251 = vmatpush2.msra.mxu0 0.0
      %252 = vmatprep.subr.mxu0 0.0
      %253 = vmatpush2.msra.mxu0 0.0
      %254 = vmatprep.subr.mxu0 0.0
      %255 = vmatpush2.msra.mxu0 0.0
      %256 = vmatprep.subr.mxu0 0.0
      %257 = vmatpush2.msra.mxu0 0.0
      %258 = vmatprep.subr.mxu0 0.0
      %259 = vmatpush2.msra.mxu0 0.0
      %260 = vmatprep.subr.mxu0 0.0
      %261 = vmatpush2.msra.mxu0 0.0
      %262 = vmatprep.subr.mxu0 0.0
      %263 = vmatpush2.msra.mxu0 0.0
      %264 = vmatprep.subr.mxu0 0.0
      %265 = vmatpush2.msra.mxu0 0.0
      %266 = vmatprep.subr.mxu0 0.0
      %267 = vmatpush2.msra.mxu0 0.0
      %268 = vmatprep.mubr.f32.mxu0 0.0
      %v269 = vand.u32 %v198, 4294901760
      %v270 = vsub.f32 %v198, %v269
      %v271 = vand.u32 %v270, 4294901760
      %v272 = vsub.f32 %v270, %v271
      %v273 = vand.u32 %v272, 4294901760
      %274 = vmatmul.mubr.f32.gmra.mxu0 %v273
      %v275 = vpop.f32.mrf.mxu0
      %v276 = vadd.f32 %v194, %v275
      %v277 = vpop.f32.mrf.mxu0
      %278 = vdwg.mxu0
      %279 = vmatprep.subr.mxu0 0.0
      %280 = vmatpush1.msra.mxu0 0.0
      %281 = vmatprep.subr.mxu0 0.0
      %282 = vmatpush1.msra.mxu0 0.0
      %283 = vmatprep.subr.mxu0 0.0
      %284 = vmatpush1.msra.mxu0 0.0
      %285 = vmatprep.subr.mxu0 0.0
      %286 = vmatpush1.msra.mxu0 0.0
      %287 = vmatprep.subr.mxu0 0.0
      %288 = vmatpush1.msra.mxu0 0.0
      %289 = vmatprep.subr.mxu0 0.0
      %290 = vmatpush1.msra.mxu0 0.0
      %291 = vmatprep.subr.mxu0 0.0
      %292 = vmatpush1.msra.mxu0 0.0
      %293 = vmatprep.subr.mxu0 0.0
      %294 = vmatpush1.msra.mxu0 0.0
      %295 = vmatprep.subr.mxu0 0.0
      %296 = vmatpush1.msra.mxu0 0.0
      %297 = vmatprep.subr.mxu0 0.0
      %298 = vmatpush1.msra.mxu0 0.0
      %299 = vmatprep.subr.mxu0 0.0
      %300 = vmatpush1.msra.mxu0 0.0
      %301 = vmatprep.subr.mxu0 0.0
      %302 = vmatpush1.msra.mxu0 0.0
      %303 = vmatprep.subr.mxu0 0.0
      %v304 = vand.u32 %v188, 4294901760
      %v305 = vsub.f32 %v188, %v304
      %v306 = vand.u32 %v305, 4294901760
      %v307 = vsub.f32 %v305, %v306
      %v308 = vand.u32 %v307, 4294901760
      %309 = vmatpush1.msra.mxu0 %v308
      %310 = vmatprep.subr.mxu0 0.0
      %v311 = vand.u32 %v187, 4294901760
      %v312 = vsub.f32 %v187, %v311
      %v313 = vand.u32 %v312, 4294901760
      %v314 = vsub.f32 %v312, %v313
      %v315 = vand.u32 %v314, 4294901760
      %316 = vmatpush1.msra.mxu0 %v315
      %317 = vmatprep.subr.mxu0 0.0
      %v318 = vand.u32 %v186, 4294901760
      %v319 = vsub.f32 %v186, %v318
      %v320 = vand.u32 %v319, 4294901760
      %v321 = vsub.f32 %v319, %v320
      %v322 = vand.u32 %v321, 4294901760
      %323 = vmatpush1.msra.mxu0 %v322
      %324 = vmatprep.subr.mxu0 0.0
      %v325 = vand.u32 %v185, 4294901760
      %v326 = vsub.f32 %v185, %v325
      %v327 = vand.u32 %v326, 4294901760
      %v328 = vsub.f32 %v326, %v327
      %v329 = vand.u32 %v328, 4294901760
      %330 = vmatpush1.msra.mxu0 %v329
      %331 = vmatprep.subr.mxu0 0.0
      %332 = vmatpush2.msra.mxu0 0.0
      %333 = vmatprep.subr.mxu0 0.0
      %334 = vmatpush2.msra.mxu0 0.0
      %335 = vmatprep.subr.mxu0 0.0
      %336 = vmatpush2.msra.mxu0 0.0
      %337 = vmatprep.subr.mxu0 0.0
      %338 = vmatpush2.msra.mxu0 0.0
      %339 = vmatprep.subr.mxu0 0.0
      %340 = vmatpush2.msra.mxu0 0.0
      %341 = vmatprep.subr.mxu0 0.0
      %342 = vmatpush2.msra.mxu0 0.0
      %343 = vmatprep.subr.mxu0 0.0
      %344 = vmatpush2.msra.mxu0 0.0
      %345 = vmatprep.subr.mxu0 0.0
      %346 = vmatpush2.msra.mxu0 0.0
      %347 = vmatprep.subr.mxu0 0.0
      %348 = vmatpush2.msra.mxu0 0.0
      %349 = vmatprep.subr.mxu0 0.0
      %350 = vmatpush2.msra.mxu0 0.0
      %351 = vmatprep.subr.mxu0 0.0
      %352 = vmatpush2.msra.mxu0 0.0
      %353 = vmatprep.subr.mxu0 0.0
      %354 = vmatpush2.msra.mxu0 0.0
      %355 = vmatprep.subr.mxu0 0.0
      %356 = vmatpush2.msra.mxu0 0.0
      %357 = vmatprep.subr.mxu0 0.0
      %358 = vmatpush2.msra.mxu0 0.0
      %359 = vmatprep.subr.mxu0 0.0
      %360 = vmatpush2.msra.mxu0 0.0
      %361 = vmatprep.subr.mxu0 0.0
      %362 = vmatpush2.msra.mxu0 0.0
      %363 = vmatprep.mubr.f32.mxu0 0.0
      %v364 = vand.u32 %v198, 4294901760
      %365 = vmatmul.mubr.f32.gmra.mxu0 %v364
      %v366 = vpop.f32.mrf.mxu0
      %v367 = vadd.f32 %v276, %v366
      %v368 = vpop.f32.mrf.mxu0
      %369 = vdwg.mxu0
      %370 = vmatprep.subr.mxu0 0.0
      %371 = vmatpush1.msra.mxu0 0.0
      %372 = vmatprep.subr.mxu0 0.0
      %373 = vmatpush1.msra.mxu0 0.0
      %374 = vmatprep.subr.mxu0 0.0
      %375 = vmatpush1.msra.mxu0 0.0
      %376 = vmatprep.subr.mxu0 0.0
      %377 = vmatpush1.msra.mxu0 0.0
      %378 = vmatprep.subr.mxu0 0.0
      %379 = vmatpush1.msra.mxu0 0.0
      %380 = vmatprep.subr.mxu0 0.0
      %381 = vmatpush1.msra.mxu0 0.0
      %382 = vmatprep.subr.mxu0 0.0
      %383 = vmatpush1.msra.mxu0 0.0
      %384 = vmatprep.subr.mxu0 0.0
      %385 = vmatpush1.msra.mxu0 0.0
      %386 = vmatprep.subr.mxu0 0.0
      %387 = vmatpush1.msra.mxu0 0.0
      %388 = vmatprep.subr.mxu0 0.0
      %389 = vmatpush1.msra.mxu0 0.0
      %390 = vmatprep.subr.mxu0 0.0
      %391 = vmatpush1.msra.mxu0 0.0
      %392 = vmatprep.subr.mxu0 0.0
      %393 = vmatpush1.msra.mxu0 0.0
      %394 = vmatprep.subr.mxu0 0.0
      %v395 = vand.u32 %v188, 4294901760
      %v396 = vsub.f32 %v188, %v395
      %397 = vmatpush1.msra.mxu0 %v396
      %398 = vmatprep.subr.mxu0 0.0
      %v399 = vand.u32 %v187, 4294901760
      %v400 = vsub.f32 %v187, %v399
      %401 = vmatpush1.msra.mxu0 %v400
      %402 = vmatprep.subr.mxu0 0.0
      %v403 = vand.u32 %v186, 4294901760
      %v404 = vsub.f32 %v186, %v403
      %405 = vmatpush1.msra.mxu0 %v404
      %406 = vmatprep.subr.mxu0 0.0
      %v407 = vand.u32 %v185, 4294901760
      %v408 = vsub.f32 %v185, %v407
      %409 = vmatpush1.msra.mxu0 %v408
      %410 = vmatprep.subr.mxu0 0.0
      %411 = vmatpush2.msra.mxu0 0.0
      %412 = vmatprep.subr.mxu0 0.0
      %413 = vmatpush2.msra.mxu0 0.0
      %414 = vmatprep.subr.mxu0 0.0
      %415 = vmatpush2.msra.mxu0 0.0
      %416 = vmatprep.subr.mxu0 0.0
      %417 = vmatpush2.msra.mxu0 0.0
      %418 = vmatprep.subr.mxu0 0.0
      %419 = vmatpush2.msra.mxu0 0.0
      %420 = vmatprep.subr.mxu0 0.0
      %421 = vmatpush2.msra.mxu0 0.0
      %422 = vmatprep.subr.mxu0 0.0
      %423 = vmatpush2.msra.mxu0 0.0
      %424 = vmatprep.subr.mxu0 0.0
      %425 = vmatpush2.msra.mxu0 0.0
      %426 = vmatprep.subr.mxu0 0.0
      %427 = vmatpush2.msra.mxu0 0.0
      %428 = vmatprep.subr.mxu0 0.0
      %429 = vmatpush2.msra.mxu0 0.0
      %430 = vmatprep.subr.mxu0 0.0
      %431 = vmatpush2.msra.mxu0 0.0
      %432 = vmatprep.subr.mxu0 0.0
      %433 = vmatpush2.msra.mxu0 0.0
      %434 = vmatprep.subr.mxu0 0.0
      %435 = vmatpush2.msra.mxu0 0.0
      %436 = vmatprep.subr.mxu0 0.0
      %437 = vmatpush2.msra.mxu0 0.0
      %438 = vmatprep.subr.mxu0 0.0
      %439 = vmatpush2.msra.mxu0 0.0
      %440 = vmatprep.subr.mxu0 0.0
      %441 = vmatpush2.msra.mxu0 0.0
      %442 = vmatprep.mubr.f32.mxu0 0.0
      %v443 = vand.u32 %v198, 4294901760
      %v444 = vsub.f32 %v198, %v443
      %445 = vmatmul.mubr.f32.gmra.mxu0 %v444
      %v446 = vpop.f32.mrf.mxu0
      %v447 = vadd.f32 %v367, %v446
      %v448 = vpop.f32.mrf.mxu0
      %449 = vdwg.mxu0
      %450 = vmatprep.subr.mxu0 0.0
      %451 = vmatpush1.msra.mxu0 0.0
      %452 = vmatprep.subr.mxu0 0.0
      %453 = vmatpush1.msra.mxu0 0.0
      %454 = vmatprep.subr.mxu0 0.0
      %455 = vmatpush1.msra.mxu0 0.0
      %456 = vmatprep.subr.mxu0 0.0
      %457 = vmatpush1.msra.mxu0 0.0
      %458 = vmatprep.subr.mxu0 0.0
      %459 = vmatpush1.msra.mxu0 0.0
      %460 = vmatprep.subr.mxu0 0.0
      %461 = vmatpush1.msra.mxu0 0.0
      %462 = vmatprep.subr.mxu0 0.0
      %463 = vmatpush1.msra.mxu0 0.0
      %464 = vmatprep.subr.mxu0 0.0
      %465 = vmatpush1.msra.mxu0 0.0
      %466 = vmatprep.subr.mxu0 0.0
      %467 = vmatpush1.msra.mxu0 0.0
      %468 = vmatprep.subr.mxu0 0.0
      %469 = vmatpush1.msra.mxu0 0.0
      %470 = vmatprep.subr.mxu0 0.0
      %471 = vmatpush1.msra.mxu0 0.0
      %472 = vmatprep.subr.mxu0 0.0
      %473 = vmatpush1.msra.mxu0 0.0
      %474 = vmatprep.subr.mxu0 0.0
      %v475 = vand.u32 %v188, 4294901760
      %476 = vmatpush1.msra.mxu0 %v475
      %477 = vmatprep.subr.mxu0 0.0
      %v478 = vand.u32 %v187, 4294901760
      %479 = vmatpush1.msra.mxu0 %v478
      %480 = vmatprep.subr.mxu0 0.0
      %v481 = vand.u32 %v186, 4294901760
      %482 = vmatpush1.msra.mxu0 %v481
      %483 = vmatprep.subr.mxu0 0.0
      %v484 = vand.u32 %v185, 4294901760
      %485 = vmatpush1.msra.mxu0 %v484
      %486 = vmatprep.subr.mxu0 0.0
      %487 = vmatpush2.msra.mxu0 0.0
      %488 = vmatprep.subr.mxu0 0.0
      %489 = vmatpush2.msra.mxu0 0.0
      %490 = vmatprep.subr.mxu0 0.0
      %491 = vmatpush2.msra.mxu0 0.0
      %492 = vmatprep.subr.mxu0 0.0
      %493 = vmatpush2.msra.mxu0 0.0
      %494 = vmatprep.subr.mxu0 0.0
      %495 = vmatpush2.msra.mxu0 0.0
      %496 = vmatprep.subr.mxu0 0.0
      %497 = vmatpush2.msra.mxu0 0.0
      %498 = vmatprep.subr.mxu0 0.0
      %499 = vmatpush2.msra.mxu0 0.0
      %500 = vmatprep.subr.mxu0 0.0
      %501 = vmatpush2.msra.mxu0 0.0
      %502 = vmatprep.subr.mxu0 0.0
      %503 = vmatpush2.msra.mxu0 0.0
      %504 = vmatprep.subr.mxu0 0.0
      %505 = vmatpush2.msra.mxu0 0.0
      %506 = vmatprep.subr.mxu0 0.0
      %507 = vmatpush2.msra.mxu0 0.0
      %508 = vmatprep.subr.mxu0 0.0
      %509 = vmatpush2.msra.mxu0 0.0
      %510 = vmatprep.subr.mxu0 0.0
      %511 = vmatpush2.msra.mxu0 0.0
      %512 = vmatprep.subr.mxu0 0.0
      %513 = vmatpush2.msra.mxu0 0.0
      %514 = vmatprep.subr.mxu0 0.0
      %515 = vmatpush2.msra.mxu0 0.0
      %516 = vmatprep.subr.mxu0 0.0
      %517 = vmatpush2.msra.mxu0 0.0
      %518 = vmatprep.mubr.f32.mxu0 0.0
      %v519 = vand.u32 %v198, 4294901760
      %v520 = vsub.f32 %v198, %v519
      %v521 = vand.u32 %v520, 4294901760
      %522 = vmatmul.mubr.f32.gmra.mxu0 %v521
      %v523 = vpop.f32.mrf.mxu0
      %v524 = vadd.f32 %v447, %v523
      %v525 = vpop.f32.mrf.mxu0
      %526 = vdwg.mxu0
      %527 = vmatprep.subr.mxu0 0.0
      %528 = vmatpush1.msra.mxu0 0.0
      %529 = vmatprep.subr.mxu0 0.0
      %530 = vmatpush1.msra.mxu0 0.0
      %531 = vmatprep.subr.mxu0 0.0
      %532 = vmatpush1.msra.mxu0 0.0
      %533 = vmatprep.subr.mxu0 0.0
      %534 = vmatpush1.msra.mxu0 0.0
      %535 = vmatprep.subr.mxu0 0.0
      %536 = vmatpush1.msra.mxu0 0.0
      %537 = vmatprep.subr.mxu0 0.0
      %538 = vmatpush1.msra.mxu0 0.0
      %539 = vmatprep.subr.mxu0 0.0
      %540 = vmatpush1.msra.mxu0 0.0
      %541 = vmatprep.subr.mxu0 0.0
      %542 = vmatpush1.msra.mxu0 0.0
      %543 = vmatprep.subr.mxu0 0.0
      %544 = vmatpush1.msra.mxu0 0.0
      %545 = vmatprep.subr.mxu0 0.0
      %546 = vmatpush1.msra.mxu0 0.0
      %547 = vmatprep.subr.mxu0 0.0
      %548 = vmatpush1.msra.mxu0 0.0
      %549 = vmatprep.subr.mxu0 0.0
      %550 = vmatpush1.msra.mxu0 0.0
      %551 = vmatprep.subr.mxu0 0.0
      %v552 = vand.u32 %v188, 4294901760
      %v553 = vsub.f32 %v188, %v552
      %v554 = vand.u32 %v553, 4294901760
      %555 = vmatpush1.msra.mxu0 %v554
      %556 = vmatprep.subr.mxu0 0.0
      %v557 = vand.u32 %v187, 4294901760
      %v558 = vsub.f32 %v187, %v557
      %v559 = vand.u32 %v558, 4294901760
      %560 = vmatpush1.msra.mxu0 %v559
      %561 = vmatprep.subr.mxu0 0.0
      %v562 = vand.u32 %v186, 4294901760
      %v563 = vsub.f32 %v186, %v562
      %v564 = vand.u32 %v563, 4294901760
      %565 = vmatpush1.msra.mxu0 %v564
      %566 = vmatprep.subr.mxu0 0.0
      %v567 = vand.u32 %v185, 4294901760
      %v568 = vsub.f32 %v185, %v567
      %v569 = vand.u32 %v568, 4294901760
      %570 = vmatpush1.msra.mxu0 %v569
      %571 = vmatprep.subr.mxu0 0.0
      %572 = vmatpush2.msra.mxu0 0.0
      %573 = vmatprep.subr.mxu0 0.0
      %574 = vmatpush2.msra.mxu0 0.0
      %575 = vmatprep.subr.mxu0 0.0
      %576 = vmatpush2.msra.mxu0 0.0
      %577 = vmatprep.subr.mxu0 0.0
      %578 = vmatpush2.msra.mxu0 0.0
      %579 = vmatprep.subr.mxu0 0.0
      %580 = vmatpush2.msra.mxu0 0.0
      %581 = vmatprep.subr.mxu0 0.0
      %582 = vmatpush2.msra.mxu0 0.0
      %583 = vmatprep.subr.mxu0 0.0
      %584 = vmatpush2.msra.mxu0 0.0
      %585 = vmatprep.subr.mxu0 0.0
      %586 = vmatpush2.msra.mxu0 0.0
      %587 = vmatprep.subr.mxu0 0.0
      %588 = vmatpush2.msra.mxu0 0.0
      %589 = vmatprep.subr.mxu0 0.0
      %590 = vmatpush2.msra.mxu0 0.0
      %591 = vmatprep.subr.mxu0 0.0
      %592 = vmatpush2.msra.mxu0 0.0
      %593 = vmatprep.subr.mxu0 0.0
      %594 = vmatpush2.msra.mxu0 0.0
      %595 = vmatprep.subr.mxu0 0.0
      %596 = vmatpush2.msra.mxu0 0.0
      %597 = vmatprep.subr.mxu0 0.0
      %598 = vmatpush2.msra.mxu0 0.0
      %599 = vmatprep.subr.mxu0 0.0
      %600 = vmatpush2.msra.mxu0 0.0
      %601 = vmatprep.subr.mxu0 0.0
      %602 = vmatpush2.msra.mxu0 0.0
      %603 = vmatprep.mubr.f32.mxu0 0.0
      %v604 = vand.u32 %v198, 4294901760
      %605 = vmatmul.mubr.f32.gmra.mxu0 %v604
      %v606 = vpop.f32.mrf.mxu0
      %v607 = vadd.f32 %v524, %v606
      %v608 = vpop.f32.mrf.mxu0
      %609 = vdwg.mxu0
      %610 = vmatprep.subr.mxu0 0.0
      %611 = vmatpush1.msra.mxu0 0.0
      %612 = vmatprep.subr.mxu0 0.0
      %613 = vmatpush1.msra.mxu0 0.0
      %614 = vmatprep.subr.mxu0 0.0
      %615 = vmatpush1.msra.mxu0 0.0
      %616 = vmatprep.subr.mxu0 0.0
      %617 = vmatpush1.msra.mxu0 0.0
      %618 = vmatprep.subr.mxu0 0.0
      %619 = vmatpush1.msra.mxu0 0.0
      %620 = vmatprep.subr.mxu0 0.0
      %621 = vmatpush1.msra.mxu0 0.0
      %622 = vmatprep.subr.mxu0 0.0
      %623 = vmatpush1.msra.mxu0 0.0
      %624 = vmatprep.subr.mxu0 0.0
      %625 = vmatpush1.msra.mxu0 0.0
      %626 = vmatprep.subr.mxu0 0.0
      %627 = vmatpush1.msra.mxu0 0.0
      %628 = vmatprep.subr.mxu0 0.0
      %629 = vmatpush1.msra.mxu0 0.0
      %630 = vmatprep.subr.mxu0 0.0
      %631 = vmatpush1.msra.mxu0 0.0
      %632 = vmatprep.subr.mxu0 0.0
      %633 = vmatpush1.msra.mxu0 0.0
      %634 = vmatprep.subr.mxu0 0.0
      %v635 = vand.u32 %v188, 4294901760
      %636 = vmatpush1.msra.mxu0 %v635
      %637 = vmatprep.subr.mxu0 0.0
      %v638 = vand.u32 %v187, 4294901760
      %639 = vmatpush1.msra.mxu0 %v638
      %640 = vmatprep.subr.mxu0 0.0
      %v641 = vand.u32 %v186, 4294901760
      %642 = vmatpush1.msra.mxu0 %v641
      %643 = vmatprep.subr.mxu0 0.0
      %v644 = vand.u32 %v185, 4294901760
      %645 = vmatpush1.msra.mxu0 %v644
      %646 = vmatprep.subr.mxu0 0.0
      %647 = vmatpush2.msra.mxu0 0.0
      %648 = vmatprep.subr.mxu0 0.0
      %649 = vmatpush2.msra.mxu0 0.0
      %650 = vmatprep.subr.mxu0 0.0
      %651 = vmatpush2.msra.mxu0 0.0
      %652 = vmatprep.subr.mxu0 0.0
      %653 = vmatpush2.msra.mxu0 0.0
      %654 = vmatprep.subr.mxu0 0.0
      %655 = vmatpush2.msra.mxu0 0.0
      %656 = vmatprep.subr.mxu0 0.0
      %657 = vmatpush2.msra.mxu0 0.0
      %658 = vmatprep.subr.mxu0 0.0
      %659 = vmatpush2.msra.mxu0 0.0
      %660 = vmatprep.subr.mxu0 0.0
      %661 = vmatpush2.msra.mxu0 0.0
      %662 = vmatprep.subr.mxu0 0.0
      %663 = vmatpush2.msra.mxu0 0.0
      %664 = vmatprep.subr.mxu0 0.0
      %665 = vmatpush2.msra.mxu0 0.0
      %666 = vmatprep.subr.mxu0 0.0
      %667 = vmatpush2.msra.mxu0 0.0
      %668 = vmatprep.subr.mxu0 0.0
      %669 = vmatpush2.msra.mxu0 0.0
      %670 = vmatprep.subr.mxu0 0.0
      %671 = vmatpush2.msra.mxu0 0.0
      %672 = vmatprep.subr.mxu0 0.0
      %673 = vmatpush2.msra.mxu0 0.0
      %674 = vmatprep.subr.mxu0 0.0
      %675 = vmatpush2.msra.mxu0 0.0
      %676 = vmatprep.subr.mxu0 0.0
      %677 = vmatpush2.msra.mxu0 0.0
      %678 = vmatprep.mubr.f32.mxu0 0.0
      %v679 = vand.u32 %v198, 4294901760
      %680 = vmatmul.mubr.f32.gmra.mxu0 %v679
      %v681 = vpop.f32.mrf.mxu0
      %v682 = vadd.f32 %v607, %v681
      %v683 = vpop.f32.mrf.mxu0
      %684 = vdwg.mxu0
      %v685 = vmax.f32 %v682, 0.0
      %v686 = vld [vmem:[#allocation9] sm:$0xff]
      %v687 = vld [vmem:[#allocation9 + $0x8] sm:$0xff]
      %v688 = vld [vmem:[#allocation9 + $0x10] sm:$0xff]
      %v689 = vld [vmem:[#allocation9 + $0x18] sm:$0xff]
      %v690 = vld [vmem:[#allocation9 + $0x20] sm:$0xff]
      %v691 = vld [vmem:[#allocation9 + $0x28] sm:$0xff]
      %v692 = vld [vmem:[#allocation9 + $0x30] sm:$0xff]
      %v693 = vld [vmem:[#allocation9 + $0x38] sm:$0xff]
      %v694 = vld [vmem:[#allocation9 + $0x40] sm:$0xff]
      %v695 = vld [vmem:[#allocation9 + $0x48] sm:$0xff]
      %v696 = vld [vmem:[#allocation9 + $0x50] sm:$0xff]
      %v697 = vld [vmem:[#allocation9 + $0x58] sm:$0xff]
      %v698 = vld [vmem:[#allocation9 + $0x60] sm:$0xff]
      %v699 = vld [vmem:[#allocation9 + $0x68] sm:$0xff]
      %v700 = vld [vmem:[#allocation9 + $0x70] sm:$0xff]
      %v701 = vld [vmem:[#allocation9 + $0x78] sm:$0xff]
      %v702 = vld [vmem:[%s7] sm:$0x1]
      %v704 = vlaneseq
      %v705 = vshrl.u32 %v704, 7
      %v706 = vsub.s32 0, %v705
      %v707 = vrot.slane %v702, %v706
      %709 = vmatprep.subr.mxu0 0.0
      %v710 = vand.u32 %v701, 4294901760
      %711 = vmatpush1.msra.mxu0 %v710
      %712 = vmatprep.subr.mxu0 0.0
      %v713 = vand.u32 %v700, 4294901760
      %714 = vmatpush1.msra.mxu0 %v713
      %715 = vmatprep.subr.mxu0 0.0
      %v716 = vand.u32 %v699, 4294901760
      %717 = vmatpush1.msra.mxu0 %v716
      %718 = vmatprep.subr.mxu0 0.0
      %v719 = vand.u32 %v698, 4294901760
      %720 = vmatpush1.msra.mxu0 %v719
      %721 = vmatprep.subr.mxu0 0.0
      %v722 = vand.u32 %v697, 4294901760
      %723 = vmatpush1.msra.mxu0 %v722
      %724 = vmatprep.subr.mxu0 0.0
      %v725 = vand.u32 %v696, 4294901760
      %726 = vmatpush1.msra.mxu0 %v725
      %727 = vmatprep.subr.mxu0 0.0
      %v728 = vand.u32 %v695, 4294901760
      %729 = vmatpush1.msra.mxu0 %v728
      %730 = vmatprep.subr.mxu0 0.0
      %v731 = vand.u32 %v694, 4294901760
      %732 = vmatpush1.msra.mxu0 %v731
      %733 = vmatprep.subr.mxu0 0.0
      %v734 = vand.u32 %v693, 4294901760
      %735 = vmatpush1.msra.mxu0 %v734
      %736 = vmatprep.subr.mxu0 0.0
      %v737 = vand.u32 %v692, 4294901760
      %738 = vmatpush1.msra.mxu0 %v737
      %739 = vmatprep.subr.mxu0 0.0
      %v740 = vand.u32 %v691, 4294901760
      %741 = vmatpush1.msra.mxu0 %v740
      %742 = vmatprep.subr.mxu0 0.0
      %v743 = vand.u32 %v690, 4294901760
      %744 = vmatpush1.msra.mxu0 %v743
      %745 = vmatprep.subr.mxu0 0.0
      %v746 = vand.u32 %v689, 4294901760
      %747 = vmatpush1.msra.mxu0 %v746
      %748 = vmatprep.subr.mxu0 0.0
      %v749 = vand.u32 %v688, 4294901760
      %750 = vmatpush1.msra.mxu0 %v749
      %751 = vmatprep.subr.mxu0 0.0
      %v752 = vand.u32 %v687, 4294901760
      %753 = vmatpush1.msra.mxu0 %v752
      %754 = vmatprep.subr.mxu0 0.0
      %v755 = vand.u32 %v686, 4294901760
      %756 = vmatpush1.msra.mxu0 %v755
      %757 = vmatprep.subr.mxu0 0.0
      %758 = vmatpush2.msra.mxu0 0.0
      %759 = vmatprep.subr.mxu0 0.0
      %760 = vmatpush2.msra.mxu0 0.0
      %761 = vmatprep.subr.mxu0 0.0
      %762 = vmatpush2.msra.mxu0 0.0
      %763 = vmatprep.subr.mxu0 0.0
      %764 = vmatpush2.msra.mxu0 0.0
      %765 = vmatprep.subr.mxu0 0.0
      %766 = vmatpush2.msra.mxu0 0.0
      %767 = vmatprep.subr.mxu0 0.0
      %768 = vmatpush2.msra.mxu0 0.0
      %769 = vmatprep.subr.mxu0 0.0
      %770 = vmatpush2.msra.mxu0 0.0
      %771 = vmatprep.subr.mxu0 0.0
      %772 = vmatpush2.msra.mxu0 0.0
      %773 = vmatprep.subr.mxu0 0.0
      %774 = vmatpush2.msra.mxu0 0.0
      %775 = vmatprep.subr.mxu0 0.0
      %776 = vmatpush2.msra.mxu0 0.0
      %777 = vmatprep.subr.mxu0 0.0
      %778 = vmatpush2.msra.mxu0 0.0
      %779 = vmatprep.subr.mxu0 0.0
      %780 = vmatpush2.msra.mxu0 0.0
      %781 = vmatprep.subr.mxu0 0.0
      %782 = vmatpush2.msra.mxu0 0.0
      %783 = vmatprep.subr.mxu0 0.0
      %784 = vmatpush2.msra.mxu0 0.0
      %785 = vmatprep.subr.mxu0 0.0
      %786 = vmatpush2.msra.mxu0 0.0
      %787 = vmatprep.subr.mxu0 0.0
      %788 = vmatpush2.msra.mxu0 0.0
      %789 = vmatprep.mubr.f32.mxu0 0.0
      %v790 = vand.u32 %v685, 4294901760
      %v791 = vsub.f32 %v685, %v790
      %v792 = vand.u32 %v791, 4294901760
      %v793 = vsub.f32 %v791, %v792
      %v794 = vand.u32 %v793, 4294901760
      %795 = vmatmul.mubr.f32.gmra.mxu0 %v794
      %v796 = vpop.f32.mrf.mxu0
      %v797 = vadd.f32 %v707, %v796
      %v798 = vpop.f32.mrf.mxu0
      %799 = vdwg.mxu0
      %800 = vmatprep.subr.mxu0 0.0
      %v801 = vand.u32 %v701, 4294901760
      %v802 = vsub.f32 %v701, %v801
      %v803 = vand.u32 %v802, 4294901760
      %v804 = vsub.f32 %v802, %v803
      %v805 = vand.u32 %v804, 4294901760
      %806 = vmatpush1.msra.mxu0 %v805
      %807 = vmatprep.subr.mxu0 0.0
      %v808 = vand.u32 %v700, 4294901760
      %v809 = vsub.f32 %v700, %v808
      %v810 = vand.u32 %v809, 4294901760
      %v811 = vsub.f32 %v809, %v810
      %v812 = vand.u32 %v811, 4294901760
      %813 = vmatpush1.msra.mxu0 %v812
      %814 = vmatprep.subr.mxu0 0.0
      %v815 = vand.u32 %v699, 4294901760
      %v816 = vsub.f32 %v699, %v815
      %v817 = vand.u32 %v816, 4294901760
      %v818 = vsub.f32 %v816, %v817
      %v819 = vand.u32 %v818, 4294901760
      %820 = vmatpush1.msra.mxu0 %v819
      %821 = vmatprep.subr.mxu0 0.0
      %v822 = vand.u32 %v698, 4294901760
      %v823 = vsub.f32 %v698, %v822
      %v824 = vand.u32 %v823, 4294901760
      %v825 = vsub.f32 %v823, %v824
      %v826 = vand.u32 %v825, 4294901760
      %827 = vmatpush1.msra.mxu0 %v826
      %828 = vmatprep.subr.mxu0 0.0
      %v829 = vand.u32 %v697, 4294901760
      %v830 = vsub.f32 %v697, %v829
      %v831 = vand.u32 %v830, 4294901760
      %v832 = vsub.f32 %v830, %v831
      %v833 = vand.u32 %v832, 4294901760
      %834 = vmatpush1.msra.mxu0 %v833
      %835 = vmatprep.subr.mxu0 0.0
      %v836 = vand.u32 %v696, 4294901760
      %v837 = vsub.f32 %v696, %v836
      %v838 = vand.u32 %v837, 4294901760
      %v839 = vsub.f32 %v837, %v838
      %v840 = vand.u32 %v839, 4294901760
      %841 = vmatpush1.msra.mxu0 %v840
      %842 = vmatprep.subr.mxu0 0.0
      %v843 = vand.u32 %v695, 4294901760
      %v844 = vsub.f32 %v695, %v843
      %v845 = vand.u32 %v844, 4294901760
      %v846 = vsub.f32 %v844, %v845
      %v847 = vand.u32 %v846, 4294901760
      %848 = vmatpush1.msra.mxu0 %v847
      %849 = vmatprep.subr.mxu0 0.0
      %v850 = vand.u32 %v694, 4294901760
      %v851 = vsub.f32 %v694, %v850
      %v852 = vand.u32 %v851, 4294901760
      %v853 = vsub.f32 %v851, %v852
      %v854 = vand.u32 %v853, 4294901760
      %855 = vmatpush1.msra.mxu0 %v854
      %856 = vmatprep.subr.mxu0 0.0
      %v857 = vand.u32 %v693, 4294901760
      %v858 = vsub.f32 %v693, %v857
      %v859 = vand.u32 %v858, 4294901760
      %v860 = vsub.f32 %v858, %v859
      %v861 = vand.u32 %v860, 4294901760
      %862 = vmatpush1.msra.mxu0 %v861
      %863 = vmatprep.subr.mxu0 0.0
      %v864 = vand.u32 %v692, 4294901760
      %v865 = vsub.f32 %v692, %v864
      %v866 = vand.u32 %v865, 4294901760
      %v867 = vsub.f32 %v865, %v866
      %v868 = vand.u32 %v867, 4294901760
      %869 = vmatpush1.msra.mxu0 %v868
      %870 = vmatprep.subr.mxu0 0.0
      %v871 = vand.u32 %v691, 4294901760
      %v872 = vsub.f32 %v691, %v871
      %v873 = vand.u32 %v872, 4294901760
      %v874 = vsub.f32 %v872, %v873
      %v875 = vand.u32 %v874, 4294901760
      %876 = vmatpush1.msra.mxu0 %v875
      %877 = vmatprep.subr.mxu0 0.0
      %v878 = vand.u32 %v690, 4294901760
      %v879 = vsub.f32 %v690, %v878
      %v880 = vand.u32 %v879, 4294901760
      %v881 = vsub.f32 %v879, %v880
      %v882 = vand.u32 %v881, 4294901760
      %883 = vmatpush1.msra.mxu0 %v882
      %884 = vmatprep.subr.mxu0 0.0
      %v885 = vand.u32 %v689, 4294901760
      %v886 = vsub.f32 %v689, %v885
      %v887 = vand.u32 %v886, 4294901760
      %v888 = vsub.f32 %v886, %v887
      %v889 = vand.u32 %v888, 4294901760
      %890 = vmatpush1.msra.mxu0 %v889
      %891 = vmatprep.subr.mxu0 0.0
      %v892 = vand.u32 %v688, 4294901760
      %v893 = vsub.f32 %v688, %v892
      %v894 = vand.u32 %v893, 4294901760
      %v895 = vsub.f32 %v893, %v894
      %v896 = vand.u32 %v895, 4294901760
      %897 = vmatpush1.msra.mxu0 %v896
      %898 = vmatprep.subr.mxu0 0.0
      %v899 = vand.u32 %v687, 4294901760
      %v900 = vsub.f32 %v687, %v899
      %v901 = vand.u32 %v900, 4294901760
      %v902 = vsub.f32 %v900, %v901
      %v903 = vand.u32 %v902, 4294901760
      %904 = vmatpush1.msra.mxu0 %v903
      %905 = vmatprep.subr.mxu0 0.0
      %v906 = vand.u32 %v686, 4294901760
      %v907 = vsub.f32 %v686, %v906
      %v908 = vand.u32 %v907, 4294901760
      %v909 = vsub.f32 %v907, %v908
      %v910 = vand.u32 %v909, 4294901760
      %911 = vmatpush1.msra.mxu0 %v910
      %912 = vmatprep.subr.mxu0 0.0
      %913 = vmatpush2.msra.mxu0 0.0
      %914 = vmatprep.subr.mxu0 0.0
      %915 = vmatpush2.msra.mxu0 0.0
      %916 = vmatprep.subr.mxu0 0.0
      %917 = vmatpush2.msra.mxu0 0.0
      %918 = vmatprep.subr.mxu0 0.0
      %919 = vmatpush2.msra.mxu0 0.0
      %920 = vmatprep.subr.mxu0 0.0
      %921 = vmatpush2.msra.mxu0 0.0
      %922 = vmatprep.subr.mxu0 0.0
      %923 = vmatpush2.msra.mxu0 0.0
      %924 = vmatprep.subr.mxu0 0.0
      %925 = vmatpush2.msra.mxu0 0.0
      %926 = vmatprep.subr.mxu0 0.0
      %927 = vmatpush2.msra.mxu0 0.0
      %928 = vmatprep.subr.mxu0 0.0
      %929 = vmatpush2.msra.mxu0 0.0
      %930 = vmatprep.subr.mxu0 0.0
      %931 = vmatpush2.msra.mxu0 0.0
      %932 = vmatprep.subr.mxu0 0.0
      %933 = vmatpush2.msra.mxu0 0.0
      %934 = vmatprep.subr.mxu0 0.0
      %935 = vmatpush2.msra.mxu0 0.0
      %936 = vmatprep.subr.mxu0 0.0
      %937 = vmatpush2.msra.mxu0 0.0
      %938 = vmatprep.subr.mxu0 0.0
      %939 = vmatpush2.msra.mxu0 0.0
      %940 = vmatprep.subr.mxu0 0.0
      %941 = vmatpush2.msra.mxu0 0.0
      %942 = vmatprep.subr.mxu0 0.0
      %943 = vmatpush2.msra.mxu0 0.0
      %944 = vmatprep.mubr.f32.mxu0 0.0
      %v945 = vand.u32 %v685, 4294901760
      %946 = vmatmul.mubr.f32.gmra.mxu0 %v945
      %v947 = vpop.f32.mrf.mxu0
      %v948 = vadd.f32 %v797, %v947
      %v949 = vpop.f32.mrf.mxu0
      %950 = vdwg.mxu0
      %951 = vmatprep.subr.mxu0 0.0
      %v952 = vand.u32 %v701, 4294901760
      %v953 = vsub.f32 %v701, %v952
      %954 = vmatpush1.msra.mxu0 %v953
      %955 = vmatprep.subr.mxu0 0.0
      %v956 = vand.u32 %v700, 4294901760
      %v957 = vsub.f32 %v700, %v956
      %958 = vmatpush1.msra.mxu0 %v957
      %959 = vmatprep.subr.mxu0 0.0
      %v960 = vand.u32 %v699, 4294901760
      %v961 = vsub.f32 %v699, %v960
      %962 = vmatpush1.msra.mxu0 %v961
      %963 = vmatprep.subr.mxu0 0.0
      %v964 = vand.u32 %v698, 4294901760
      %v965 = vsub.f32 %v698, %v964
      %966 = vmatpush1.msra.mxu0 %v965
      %967 = vmatprep.subr.mxu0 0.0
      %v968 = vand.u32 %v697, 4294901760
      %v969 = vsub.f32 %v697, %v968
      %970 = vmatpush1.msra.mxu0 %v969
      %971 = vmatprep.subr.mxu0 0.0
      %v972 = vand.u32 %v696, 4294901760
      %v973 = vsub.f32 %v696, %v972
      %974 = vmatpush1.msra.mxu0 %v973
      %975 = vmatprep.subr.mxu0 0.0
      %v976 = vand.u32 %v695, 4294901760
      %v977 = vsub.f32 %v695, %v976
      %978 = vmatpush1.msra.mxu0 %v977
      %979 = vmatprep.subr.mxu0 0.0
      %v980 = vand.u32 %v694, 4294901760
      %v981 = vsub.f32 %v694, %v980
      %982 = vmatpush1.msra.mxu0 %v981
      %983 = vmatprep.subr.mxu0 0.0
      %v984 = vand.u32 %v693, 4294901760
      %v985 = vsub.f32 %v693, %v984
      %986 = vmatpush1.msra.mxu0 %v985
      %987 = vmatprep.subr.mxu0 0.0
      %v988 = vand.u32 %v692, 4294901760
      %v989 = vsub.f32 %v692, %v988
      %990 = vmatpush1.msra.mxu0 %v989
      %991 = vmatprep.subr.mxu0 0.0
      %v992 = vand.u32 %v691, 4294901760
      %v993 = vsub.f32 %v691, %v992
      %994 = vmatpush1.msra.mxu0 %v993
      %995 = vmatprep.subr.mxu0 0.0
      %v996 = vand.u32 %v690, 4294901760
      %v997 = vsub.f32 %v690, %v996
      %998 = vmatpush1.msra.mxu0 %v997
      %999 = vmatprep.subr.mxu0 0.0
      %v1000 = vand.u32 %v689, 4294901760
      %v1001 = vsub.f32 %v689, %v1000
      %1002 = vmatpush1.msra.mxu0 %v1001
      %1003 = vmatprep.subr.mxu0 0.0
      %v1004 = vand.u32 %v688, 4294901760
      %v1005 = vsub.f32 %v688, %v1004
      %1006 = vmatpush1.msra.mxu0 %v1005
      %1007 = vmatprep.subr.mxu0 0.0
      %v1008 = vand.u32 %v687, 4294901760
      %v1009 = vsub.f32 %v687, %v1008
      %1010 = vmatpush1.msra.mxu0 %v1009
      %1011 = vmatprep.subr.mxu0 0.0
      %v1012 = vand.u32 %v686, 4294901760
      %v1013 = vsub.f32 %v686, %v1012
      %1014 = vmatpush1.msra.mxu0 %v1013
      %1015 = vmatprep.subr.mxu0 0.0
      %1016 = vmatpush2.msra.mxu0 0.0
      %1017 = vmatprep.subr.mxu0 0.0
      %1018 = vmatpush2.msra.mxu0 0.0
      %1019 = vmatprep.subr.mxu0 0.0
      %1020 = vmatpush2.msra.mxu0 0.0
      %1021 = vmatprep.subr.mxu0 0.0
      %1022 = vmatpush2.msra.mxu0 0.0
      %1023 = vmatprep.subr.mxu0 0.0
      %1024 = vmatpush2.msra.mxu0 0.0
      %1025 = vmatprep.subr.mxu0 0.0
      %1026 = vmatpush2.msra.mxu0 0.0
      %1027 = vmatprep.subr.mxu0 0.0
      %1028 = vmatpush2.msra.mxu0 0.0
      %1029 = vmatprep.subr.mxu0 0.0
      %1030 = vmatpush2.msra.mxu0 0.0
      %1031 = vmatprep.subr.mxu0 0.0
      %1032 = vmatpush2.msra.mxu0 0.0
      %1033 = vmatprep.subr.mxu0 0.0
      %1034 = vmatpush2.msra.mxu0 0.0
      %1035 = vmatprep.subr.mxu0 0.0
      %1036 = vmatpush2.msra.mxu0 0.0
      %1037 = vmatprep.subr.mxu0 0.0
      %1038 = vmatpush2.msra.mxu0 0.0
      %1039 = vmatprep.subr.mxu0 0.0
      %1040 = vmatpush2.msra.mxu0 0.0
      %1041 = vmatprep.subr.mxu0 0.0
      %1042 = vmatpush2.msra.mxu0 0.0
      %1043 = vmatprep.subr.mxu0 0.0
      %1044 = vmatpush2.msra.mxu0 0.0
      %1045 = vmatprep.subr.mxu0 0.0
      %1046 = vmatpush2.msra.mxu0 0.0
      %1047 = vmatprep.mubr.f32.mxu0 0.0
      %v1048 = vand.u32 %v685, 4294901760
      %v1049 = vsub.f32 %v685, %v1048
      %1050 = vmatmul.mubr.f32.gmra.mxu0 %v1049
      %v1051 = vpop.f32.mrf.mxu0
      %v1052 = vadd.f32 %v948, %v1051
      %v1053 = vpop.f32.mrf.mxu0
      %1054 = vdwg.mxu0
      %1055 = vmatprep.subr.mxu0 0.0
      %v1056 = vand.u32 %v701, 4294901760
      %1057 = vmatpush1.msra.mxu0 %v1056
      %1058 = vmatprep.subr.mxu0 0.0
      %v1059 = vand.u32 %v700, 4294901760
      %1060 = vmatpush1.msra.mxu0 %v1059
      %1061 = vmatprep.subr.mxu0 0.0
      %v1062 = vand.u32 %v699, 4294901760
      %1063 = vmatpush1.msra.mxu0 %v1062
      %1064 = vmatprep.subr.mxu0 0.0
      %v1065 = vand.u32 %v698, 4294901760
      %1066 = vmatpush1.msra.mxu0 %v1065
      %1067 = vmatprep.subr.mxu0 0.0
      %v1068 = vand.u32 %v697, 4294901760
      %1069 = vmatpush1.msra.mxu0 %v1068
      %1070 = vmatprep.subr.mxu0 0.0
      %v1071 = vand.u32 %v696, 4294901760
      %1072 = vmatpush1.msra.mxu0 %v1071
      %1073 = vmatprep.subr.mxu0 0.0
      %v1074 = vand.u32 %v695, 4294901760
      %1075 = vmatpush1.msra.mxu0 %v1074
      %1076 = vmatprep.subr.mxu0 0.0
      %v1077 = vand.u32 %v694, 4294901760
      %1078 = vmatpush1.msra.mxu0 %v1077
      %1079 = vmatprep.subr.mxu0 0.0
      %v1080 = vand.u32 %v693, 4294901760
      %1081 = vmatpush1.msra.mxu0 %v1080
      %1082 = vmatprep.subr.mxu0 0.0
      %v1083 = vand.u32 %v692, 4294901760
      %1084 = vmatpush1.msra.mxu0 %v1083
      %1085 = vmatprep.subr.mxu0 0.0
      %v1086 = vand.u32 %v691, 4294901760
      %1087 = vmatpush1.msra.mxu0 %v1086
      %1088 = vmatprep.subr.mxu0 0.0
      %v1089 = vand.u32 %v690, 4294901760
      %1090 = vmatpush1.msra.mxu0 %v1089
      %1091 = vmatprep.subr.mxu0 0.0
      %v1092 = vand.u32 %v689, 4294901760
      %1093 = vmatpush1.msra.mxu0 %v1092
      %1094 = vmatprep.subr.mxu0 0.0
      %v1095 = vand.u32 %v688, 4294901760
      %1096 = vmatpush1.msra.mxu0 %v1095
      %1097 = vmatprep.subr.mxu0 0.0
      %v1098 = vand.u32 %v687, 4294901760
      %1099 = vmatpush1.msra.mxu0 %v1098
      %1100 = vmatprep.subr.mxu0 0.0
      %v1101 = vand.u32 %v686, 4294901760
      %1102 = vmatpush1.msra.mxu0 %v1101
      %1103 = vmatprep.subr.mxu0 0.0
      %1104 = vmatpush2.msra.mxu0 0.0
      %1105 = vmatprep.subr.mxu0 0.0
      %1106 = vmatpush2.msra.mxu0 0.0
      %1107 = vmatprep.subr.mxu0 0.0
      %1108 = vmatpush2.msra.mxu0 0.0
      %1109 = vmatprep.subr.mxu0 0.0
      %1110 = vmatpush2.msra.mxu0 0.0
      %1111 = vmatprep.subr.mxu0 0.0
      %1112 = vmatpush2.msra.mxu0 0.0
      %1113 = vmatprep.subr.mxu0 0.0
      %1114 = vmatpush2.msra.mxu0 0.0
      %1115 = vmatprep.subr.mxu0 0.0
      %1116 = vmatpush2.msra.mxu0 0.0
      %1117 = vmatprep.subr.mxu0 0.0
      %1118 = vmatpush2.msra.mxu0 0.0
      %1119 = vmatprep.subr.mxu0 0.0
      %1120 = vmatpush2.msra.mxu0 0.0
      %1121 = vmatprep.subr.mxu0 0.0
      %1122 = vmatpush2.msra.mxu0 0.0
      %1123 = vmatprep.subr.mxu0 0.0
      %1124 = vmatpush2.msra.mxu0 0.0
      %1125 = vmatprep.subr.mxu0 0.0
      %1126 = vmatpush2.msra.mxu0 0.0
      %1127 = vmatprep.subr.mxu0 0.0
      %1128 = vmatpush2.msra.mxu0 0.0
      %1129 = vmatprep.subr.mxu0 0.0
      %1130 = vmatpush2.msra.mxu0 0.0
      %1131 = vmatprep.subr.mxu0 0.0
      %1132 = vmatpush2.msra.mxu0 0.0
      %1133 = vmatprep.subr.mxu0 0.0
      %1134 = vmatpush2.msra.mxu0 0.0
      %1135 = vmatprep.mubr.f32.mxu0 0.0
      %v1136 = vand.u32 %v685, 4294901760
      %v1137 = vsub.f32 %v685, %v1136
      %v1138 = vand.u32 %v1137, 4294901760
      %1139 = vmatmul.mubr.f32.gmra.mxu0 %v1138
      %v1140 = vpop.f32.mrf.mxu0
      %v1141 = vadd.f32 %v1052, %v1140
      %v1142 = vpop.f32.mrf.mxu0
      %1143 = vdwg.mxu0
      %1144 = vmatprep.subr.mxu0 0.0
      %v1145 = vand.u32 %v701, 4294901760
      %v1146 = vsub.f32 %v701, %v1145
      %v1147 = vand.u32 %v1146, 4294901760
      %1148 = vmatpush1.msra.mxu0 %v1147
      %1149 = vmatprep.subr.mxu0 0.0
      %v1150 = vand.u32 %v700, 4294901760
      %v1151 = vsub.f32 %v700, %v1150
      %v1152 = vand.u32 %v1151, 4294901760
      %1153 = vmatpush1.msra.mxu0 %v1152
      %1154 = vmatprep.subr.mxu0 0.0
      %v1155 = vand.u32 %v699, 4294901760
      %v1156 = vsub.f32 %v699, %v1155
      %v1157 = vand.u32 %v1156, 4294901760
      %1158 = vmatpush1.msra.mxu0 %v1157
      %1159 = vmatprep.subr.mxu0 0.0
      %v1160 = vand.u32 %v698, 4294901760
      %v1161 = vsub.f32 %v698, %v1160
      %v1162 = vand.u32 %v1161, 4294901760
      %1163 = vmatpush1.msra.mxu0 %v1162
      %1164 = vmatprep.subr.mxu0 0.0
      %v1165 = vand.u32 %v697, 4294901760
      %v1166 = vsub.f32 %v697, %v1165
      %v1167 = vand.u32 %v1166, 4294901760
      %1168 = vmatpush1.msra.mxu0 %v1167
      %1169 = vmatprep.subr.mxu0 0.0
      %v1170 = vand.u32 %v696, 4294901760
      %v1171 = vsub.f32 %v696, %v1170
      %v1172 = vand.u32 %v1171, 4294901760
      %1173 = vmatpush1.msra.mxu0 %v1172
      %1174 = vmatprep.subr.mxu0 0.0
      %v1175 = vand.u32 %v695, 4294901760
      %v1176 = vsub.f32 %v695, %v1175
      %v1177 = vand.u32 %v1176, 4294901760
      %1178 = vmatpush1.msra.mxu0 %v1177
      %1179 = vmatprep.subr.mxu0 0.0
      %v1180 = vand.u32 %v694, 4294901760
      %v1181 = vsub.f32 %v694, %v1180
      %v1182 = vand.u32 %v1181, 4294901760
      %1183 = vmatpush1.msra.mxu0 %v1182
      %1184 = vmatprep.subr.mxu0 0.0
      %v1185 = vand.u32 %v693, 4294901760
      %v1186 = vsub.f32 %v693, %v1185
      %v1187 = vand.u32 %v1186, 4294901760
      %1188 = vmatpush1.msra.mxu0 %v1187
      %1189 = vmatprep.subr.mxu0 0.0
      %v1190 = vand.u32 %v692, 4294901760
      %v1191 = vsub.f32 %v692, %v1190
      %v1192 = vand.u32 %v1191, 4294901760
      %1193 = vmatpush1.msra.mxu0 %v1192
      %1194 = vmatprep.subr.mxu0 0.0
      %v1195 = vand.u32 %v691, 4294901760
      %v1196 = vsub.f32 %v691, %v1195
      %v1197 = vand.u32 %v1196, 4294901760
      %1198 = vmatpush1.msra.mxu0 %v1197
      %1199 = vmatprep.subr.mxu0 0.0
      %v1200 = vand.u32 %v690, 4294901760
      %v1201 = vsub.f32 %v690, %v1200
      %v1202 = vand.u32 %v1201, 4294901760
      %1203 = vmatpush1.msra.mxu0 %v1202
      %1204 = vmatprep.subr.mxu0 0.0
      %v1205 = vand.u32 %v689, 4294901760
      %v1206 = vsub.f32 %v689, %v1205
      %v1207 = vand.u32 %v1206, 4294901760
      %1208 = vmatpush1.msra.mxu0 %v1207
      %1209 = vmatprep.subr.mxu0 0.0
      %v1210 = vand.u32 %v688, 4294901760
      %v1211 = vsub.f32 %v688, %v1210
      %v1212 = vand.u32 %v1211, 4294901760
      %1213 = vmatpush1.msra.mxu0 %v1212
      %1214 = vmatprep.subr.mxu0 0.0
      %v1215 = vand.u32 %v687, 4294901760
      %v1216 = vsub.f32 %v687, %v1215
      %v1217 = vand.u32 %v1216, 4294901760
      %1218 = vmatpush1.msra.mxu0 %v1217
      %1219 = vmatprep.subr.mxu0 0.0
      %v1220 = vand.u32 %v686, 4294901760
      %v1221 = vsub.f32 %v686, %v1220
      %v1222 = vand.u32 %v1221, 4294901760
      %1223 = vmatpush1.msra.mxu0 %v1222
      %1224 = vmatprep.subr.mxu0 0.0
      %1225 = vmatpush2.msra.mxu0 0.0
      %1226 = vmatprep.subr.mxu0 0.0
      %1227 = vmatpush2.msra.mxu0 0.0
      %1228 = vmatprep.subr.mxu0 0.0
      %1229 = vmatpush2.msra.mxu0 0.0
      %1230 = vmatprep.subr.mxu0 0.0
      %1231 = vmatpush2.msra.mxu0 0.0
      %1232 = vmatprep.subr.mxu0 0.0
      %1233 = vmatpush2.msra.mxu0 0.0
      %1234 = vmatprep.subr.mxu0 0.0
      %1235 = vmatpush2.msra.mxu0 0.0
      %1236 = vmatprep.subr.mxu0 0.0
      %1237 = vmatpush2.msra.mxu0 0.0
      %1238 = vmatprep.subr.mxu0 0.0
      %1239 = vmatpush2.msra.mxu0 0.0
      %1240 = vmatprep.subr.mxu0 0.0
      %1241 = vmatpush2.msra.mxu0 0.0
      %1242 = vmatprep.subr.mxu0 0.0
      %1243 = vmatpush2.msra.mxu0 0.0
      %1244 = vmatprep.subr.mxu0 0.0
      %1245 = vmatpush2.msra.mxu0 0.0
      %1246 = vmatprep.subr.mxu0 0.0
      %1247 = vmatpush2.msra.mxu0 0.0
      %1248 = vmatprep.subr.mxu0 0.0
      %1249 = vmatpush2.msra.mxu0 0.0
      %1250 = vmatprep.subr.mxu0 0.0
      %1251 = vmatpush2.msra.mxu0 0.0
      %1252 = vmatprep.subr.mxu0 0.0
      %1253 = vmatpush2.msra.mxu0 0.0
      %1254 = vmatprep.subr.mxu0 0.0
      %1255 = vmatpush2.msra.mxu0 0.0
      %1256 = vmatprep.mubr.f32.mxu0 0.0
      %v1257 = vand.u32 %v685, 4294901760
      %1258 = vmatmul.mubr.f32.gmra.mxu0 %v1257
      %v1259 = vpop.f32.mrf.mxu0
      %v1260 = vadd.f32 %v1141, %v1259
      %v1261 = vpop.f32.mrf.mxu0
      %1262 = vdwg.mxu0
      %1263 = vmatprep.subr.mxu0 0.0
      %v1264 = vand.u32 %v701, 4294901760
      %1265 = vmatpush1.msra.mxu0 %v1264
      %1266 = vmatprep.subr.mxu0 0.0
      %v1267 = vand.u32 %v700, 4294901760
      %1268 = vmatpush1.msra.mxu0 %v1267
      %1269 = vmatprep.subr.mxu0 0.0
      %v1270 = vand.u32 %v699, 4294901760
      %1271 = vmatpush1.msra.mxu0 %v1270
      %1272 = vmatprep.subr.mxu0 0.0
      %v1273 = vand.u32 %v698, 4294901760
      %1274 = vmatpush1.msra.mxu0 %v1273
      %1275 = vmatprep.subr.mxu0 0.0
      %v1276 = vand.u32 %v697, 4294901760
      %1277 = vmatpush1.msra.mxu0 %v1276
      %1278 = vmatprep.subr.mxu0 0.0
      %v1279 = vand.u32 %v696, 4294901760
      %1280 = vmatpush1.msra.mxu0 %v1279
      %1281 = vmatprep.subr.mxu0 0.0
      %v1282 = vand.u32 %v695, 4294901760
      %1283 = vmatpush1.msra.mxu0 %v1282
      %1284 = vmatprep.subr.mxu0 0.0
      %v1285 = vand.u32 %v694, 4294901760
      %1286 = vmatpush1.msra.mxu0 %v1285
      %1287 = vmatprep.subr.mxu0 0.0
      %v1288 = vand.u32 %v693, 4294901760
      %1289 = vmatpush1.msra.mxu0 %v1288
      %1290 = vmatprep.subr.mxu0 0.0
      %v1291 = vand.u32 %v692, 4294901760
      %1292 = vmatpush1.msra.mxu0 %v1291
      %1293 = vmatprep.subr.mxu0 0.0
      %v1294 = vand.u32 %v691, 4294901760
      %1295 = vmatpush1.msra.mxu0 %v1294
      %1296 = vmatprep.subr.mxu0 0.0
      %v1297 = vand.u32 %v690, 4294901760
      %1298 = vmatpush1.msra.mxu0 %v1297
      %1299 = vmatprep.subr.mxu0 0.0
      %v1300 = vand.u32 %v689, 4294901760
      %1301 = vmatpush1.msra.mxu0 %v1300
      %1302 = vmatprep.subr.mxu0 0.0
      %v1303 = vand.u32 %v688, 4294901760
      %1304 = vmatpush1.msra.mxu0 %v1303
      %1305 = vmatprep.subr.mxu0 0.0
      %v1306 = vand.u32 %v687, 4294901760
      %1307 = vmatpush1.msra.mxu0 %v1306
      %1308 = vmatprep.subr.mxu0 0.0
      %v1309 = vand.u32 %v686, 4294901760
      %1310 = vmatpush1.msra.mxu0 %v1309
      %1311 = vmatprep.subr.mxu0 0.0
      %1312 = vmatpush2.msra.mxu0 0.0
      %1313 = vmatprep.subr.mxu0 0.0
      %1314 = vmatpush2.msra.mxu0 0.0
      %1315 = vmatprep.subr.mxu0 0.0
      %1316 = vmatpush2.msra.mxu0 0.0
      %1317 = vmatprep.subr.mxu0 0.0
      %1318 = vmatpush2.msra.mxu0 0.0
      %1319 = vmatprep.subr.mxu0 0.0
      %1320 = vmatpush2.msra.mxu0 0.0
      %1321 = vmatprep.subr.mxu0 0.0
      %1322 = vmatpush2.msra.mxu0 0.0
      %1323 = vmatprep.subr.mxu0 0.0
      %1324 = vmatpush2.msra.mxu0 0.0
      %1325 = vmatprep.subr.mxu0 0.0
      %1326 = vmatpush2.msra.mxu0 0.0
      %1327 = vmatprep.subr.mxu0 0.0
      %1328 = vmatpush2.msra.mxu0 0.0
      %1329 = vmatprep.subr.mxu0 0.0
      %1330 = vmatpush2.msra.mxu0 0.0
      %1331 = vmatprep.subr.mxu0 0.0
      %1332 = vmatpush2.msra.mxu0 0.0
      %1333 = vmatprep.subr.mxu0 0.0
      %1334 = vmatpush2.msra.mxu0 0.0
      %1335 = vmatprep.subr.mxu0 0.0
      %1336 = vmatpush2.msra.mxu0 0.0
      %1337 = vmatprep.subr.mxu0 0.0
      %1338 = vmatpush2.msra.mxu0 0.0
      %1339 = vmatprep.subr.mxu0 0.0
      %1340 = vmatpush2.msra.mxu0 0.0
      %1341 = vmatprep.subr.mxu0 0.0
      %1342 = vmatpush2.msra.mxu0 0.0
      %1343 = vmatprep.mubr.f32.mxu0 0.0
      %v1344 = vand.u32 %v685, 4294901760
      %1345 = vmatmul.mubr.f32.gmra.mxu0 %v1344
      %v1346 = vpop.f32.mrf.mxu0
      %v1347 = vadd.f32 %v1260, %v1346
      %v1348 = vpop.f32.mrf.mxu0
      %1349 = vdwg.mxu0
      %1350 = vst [vmem:[#allocation11] sm:$0x3] %v1347
    $region45: #{encoder_embedding_output_head.1} parent=1 // pred_fallthru
      _
    // Predicated region
    $region46: #{encoder_embedding_output_head.1} parent=1 // pred_check
      _
    $region47: #{encoder_embedding_output_head.1} parent=1 // pred_check_branch
      %1352 = sbr.rel (0) target = $region49
    $region48: #{encoder_embedding_output_head.1} parent=1 // pred_region
      %s1354 = ssub.s32 32, 32
      %1355 = vsyncadd [#allocation8], %s1354
      %s1357 = sshll.u32 [#allocation11], 4
      %s1358 = int_to_ptr.vmem [resolvable:$true] %s1357
      %1360 = dma.vmem_to_hbm [thread:$0]  %s1358, 32, %s8, [#allocation8]
    $region49: #{encoder_embedding_output_head.1} parent=1 // pred_fallthru
      _
    // Predicated region
    $region50: #{encoder_embedding_output_head.1} parent=1 // pred_check
      _
    $region51: #{encoder_embedding_output_head.1} parent=1 // pred_check_branch
      %1362 = sbr.rel (0) target = $region53
    $region52: #{encoder_embedding_output_head.1} parent=1 // pred_region
      %1363 = dma.done [#allocation8], 32
    $region53: #{encoder_embedding_output_head.1} parent=1 // pred_fallthru
      _
    %1364 = vsyncpa [#allocation7], 1
    %1365 = vsyncpa [#allocation10], 1
    %1366 = vsyncpa [#allocation8], 1

</llo_original>
